<compile_context>
chip_gen: v5e
topology: v5e:2x2
jax: 0.10.0
libtpu: 0.0.40
codegen_flags: <defaults>
</compile_context>

<pallas_src>
import functools

import jax
import jax.numpy as jnp
from jax.experimental import pallas as pl
from jax.experimental.pallas import tpu as pltpu

# ----------------------------------------------------------------------------
# UNet configuration (matches the PyTorch Model defaults)
# ----------------------------------------------------------------------------
NUM_FMAPS = 12
INC = 2
DOWN_FACTORS = ((1, 2, 2), (1, 2, 2), (1, 2, 2))
KS_DOWN = (((3, 3, 3), (3, 3, 3)),
           ((3, 3, 3), (3, 3, 3)),
           ((1, 3, 3), (1, 3, 3)),
           ((1, 3, 3), (1, 3, 3)))
KS_UP = (((1, 3, 3), (1, 3, 3)),
         ((3, 3, 3), (3, 3, 3)),
         ((3, 3, 3), (3, 3, 3)))
NUM_LEVELS = len(DOWN_FACTORS) + 1
AFFS_DIMS = 6
LSDS_DIMS = 10

ACT_DTYPE = jnp.bfloat16          # wire dtype for activations / weights (f32 acc)
VMEM_LIMIT = 48 * 1024 * 1024     # <= v7x 64 MiB physical; plenty for v5e / v6e
POOL_ROWS = 512                   # row tile for the pooling kernel


def _pick_chunk(cout, l_out):
    """Lane chunk so the f32 accumulator (+ one operand slice) fits in vregs."""
    if cout <= 16:
        c = 1024
    elif cout <= 32:
        c = 512
    elif cout <= 64:
        c = 256
    else:
        c = 128
    return min(c, l_out)


# ----------------------------------------------------------------------------
# Pallas kernels
# ----------------------------------------------------------------------------
def _conv_kernel(x_ref, w_ref, b_ref, o_ref, *, kd, kh, kw, cin, cout, ws,
                 l_out, l_pad, chunk, n_chunks, act):
    """One output d-plane of a valid 3D conv on the flattened (D, C, H*W) layout.

    x_ref : (D_in, Cin, L_in)   whole input, resident in VMEM (constant index map)
    w_ref : (T, Cout, Cin)      per-tap weights, t = (kd*KH + kh)*KW + kw
    b_ref : (Cout, 1)           f32 bias
    o_ref : (1, Cout, L_emit)   output plane; column r <-> (ho, wo), r = ho*ws + wo.
                                Columns with (r % ws) >= valid_width are garbage and
                                only ever feed garbage columns downstream.
    """
    d = pl.program_id(0)
    bias = b_ref[...].astype(jnp.float32)            # (Cout, 1)

    def chunk_body(j, carry):
        # Clamp so the last (possibly ragged) chunk re-computes a few columns
        # instead of reading past the end of the resident input.
        c0 = jnp.minimum(j * chunk, l_out - chunk)
        acc = jnp.zeros((cout, chunk), jnp.float32)
        t = 0
        for dk in range(kd):
            for hk in range(kh):
                for wk in range(kw):
                    xs = x_ref[pl.ds(d + dk, 1), :,
                               pl.ds(c0 + hk * ws + wk, chunk)]
                    xs = xs.reshape(cin, chunk)
                    wt = w_ref[t]                     # (Cout, Cin)
                    if cin == 1:
                        # TODO(synk): stack taps -> one MXU dot instead of VPU path.
                        acc = acc + wt.astype(jnp.float32) * xs.astype(jnp.float32)
                    else:
                        acc = acc + jnp.dot(wt, xs,
                                            preferred_element_type=jnp.float32)
                    t += 1
        acc = acc + bias
        if act == "relu":
            acc = jnp.maximum(acc, 0.0)
        elif act == "sigmoid":
            acc = jax.nn.sigmoid(acc)
        o_ref[:, :, pl.ds(c0, chunk)] = acc[None].astype(o_ref.dtype)
        return carry

    if n_chunks > 1:
        jax.lax.fori_loop(0, n_chunks, chunk_body, 0)
    else:
        chunk_body(0, 0)

    if l_pad > 0:
        # Zero the trailing (KW-1) never-valid lanes so no uninitialized VMEM
        # garbage (potentially non-finite) is written back to HBM.
        o_ref[:, :, pl.ds(l_out, l_pad)] = jnp.zeros((1, cout, l_pad), o_ref.dtype)


def _pool_kernel(a_ref, b_ref, o_ref, *, wp):
    """(1,2,2) max-pool step.  a = even-W columns, b = odd-W columns; lanes
    [0:wp] hold the even H row and [wp:2wp] the odd H row of each output row."""
    o_ref[...] = jnp.maximum(
        jnp.maximum(a_ref[:, pl.ds(0, wp)], a_ref[:, pl.ds(wp, wp)]),
        jnp.maximum(b_ref[:, pl.ds(0, wp)], b_ref[:, pl.ds(wp, wp)]))


# ----------------------------------------------------------------------------
# Conv / pool / upsample / crop building blocks
# ----------------------------------------------------------------------------
def conv3d_raw(x_raw, w, b, ws, act):
    """Valid 3D conv on the flattened (D, Cin, L) layout with fixed row stride ws.

    Emits L_emit = L_in - (KH-1)*ws lanes so a (D, C, H_out, ws) view needs no
    pad/copy; the last KW-1 lanes are zero-filled (never valid data).
    """
    d_in, cin, l_in = x_raw.shape
    n_d, n_h, n_w, wcin, cout = w.shape
    assert wcin == cin
    d_out = d_in - n_d + 1
    smax = (n_h - 1) * ws + (n_w - 1)
    l_out = l_in - smax
    l_emit = l_in - (n_h - 1) * ws
    assert d_out > 0 and l_out > 0
    taps = n_d * n_h * n_w

    x_raw = x_raw.astype(ACT_DTYPE)
    wt = jnp.swapaxes(w.reshape(taps, cin, cout), 1, 2).astype(ACT_DTYPE)
    bt = b.reshape(cout, 1).astype(jnp.float32)

    chunk = _pick_chunk(cout, l_out)
    n_chunks = pl.cdiv(l_out, chunk)

    kernel = functools.partial(
        _conv_kernel, kd=n_d, kh=n_h, kw=n_w, cin=cin, cout=cout, ws=ws,
        l_out=l_out, l_pad=l_emit - l_out, chunk=chunk, n_chunks=n_chunks,
        act=act)

    return pl.pallas_call(
        kernel,
        out_shape=jax.ShapeDtypeStruct((d_out, cout, l_emit), ACT_DTYPE),
        grid=(d_out,),
        in_specs=[
            # Whole input as one constant-index block: DMA'd from HBM exactly once.
            pl.BlockSpec((d_in, cin, l_in), lambda d: (0, 0, 0)),
            pl.BlockSpec((taps, cout, cin), lambda d: (0, 0, 0)),
            pl.BlockSpec((cout, 1), lambda d: (0, 0)),
        ],
        out_specs=pl.BlockSpec((1, cout, l_emit), lambda d: (d, 0, 0)),
        compiler_params=pltpu.CompilerParams(
            dimension_semantics=("parallel",), vmem_limit_bytes=VMEM_LIMIT),
    )(x_raw, wt, bt)


def conv_pass(x, convs, act):
    """Chain of valid convs: dense (D, C, H, W) -> dense (Do, Cout, Ho, Wo)."""
    d, c, h, w = x.shape
    ws = w                                  # row stride fixed through the chain
    raw = x.astype(ACT_DTYPE).reshape(d, c, h * w)
    hv, wv = h, w
    for (wk, bk) in convs:
        n_d, n_h, n_w = wk.shape[:3]
        raw = conv3d_raw(raw, wk, bk, ws, act)
        hv -= n_h - 1
        wv -= n_w - 1
    d_out, c_out, l_emit = raw.shape
    assert l_emit == hv * ws
    return raw.reshape(d_out, c_out, hv, ws)[:, :, :, :wv]


def maxpool_122(x):
    """MaxPool3d with kernel = stride = (1, 2, 2) on dense (D, C, H, W)."""
    d, c, h, w = x.shape
    assert h % 2 == 0 and w % 2 == 0, "spatial dims must be divisible by pool factor"
    hp, wp = h // 2, w // 2
    rows = d * c * hp
    # Two half-size views (even / odd W); H pairs land as contiguous lane halves.
    a = x[:, :, :, 0::2].reshape(rows, 2 * wp)
    b = x[:, :, :, 1::2].reshape(rows, 2 * wp)
    br = min(POOL_ROWS, rows)
    if br != rows:
        br = max(8, (br // 8) * 8)
    out = pl.pallas_call(
        functools.partial(_pool_kernel, wp=wp),
        out_shape=jax.ShapeDtypeStruct((rows, wp), x.dtype),
        grid=(pl.cdiv(rows, br),),
        in_specs=[pl.BlockSpec((br, 2 * wp), lambda i: (i, 0))] * 2,
        out_specs=pl.BlockSpec((br, wp), lambda i: (i, 0)),
        compiler_params=pltpu.CompilerParams(
            dimension_semantics=("parallel",), vmem_limit_bytes=VMEM_LIMIT),
    )(a, b)
    return out.reshape(d, c, hp, wp)


def upsample_122(x):
    """nn.Upsample(scale_factor=(1,2,2), mode='nearest') on (D, C, H, W)."""
    return jnp.repeat(jnp.repeat(x, 2, axis=2), 2, axis=3)


def center_crop(x, target_spatial):
    sp = (x.shape[0], x.shape[2], x.shape[3])
    off = [(s - t) // 2 for s, t in zip(sp, target_spatial)]
    return x[off[0]:off[0] + target_spatial[0], :,
             off[1]:off[1] + target_spatial[1],
             off[2]:off[2] + target_spatial[2]]


def crop_to_factor(x, factor, kernel_sizes):
    """funlib Upsample.crop_to_factor (translation equivariance crop)."""
    sp = (x.shape[0], x.shape[2], x.shape[3])
    conv_crop = tuple(sum(ks[d] - 1 for ks in kernel_sizes) for d in range(3))
    ns = tuple((s - c) // f for s, c, f in zip(sp, conv_crop, factor))
    target = tuple(n * f + c for n, c, f in zip(ns, conv_crop, factor))
    if target != sp:
        assert all(t > c for t, c in zip(target, conv_crop))
        x = center_crop(x, target)
    return x


def crop_factors():
    cfs, prod = [], None
    for f in DOWN_FACTORS[::-1]:
        prod = list(f) if prod is None else [a * b for a, b in zip(f, prod)]
        cfs.append(tuple(prod))
    return cfs[::-1]


# ----------------------------------------------------------------------------
# Parameters (deterministic synthetic init)
# ----------------------------------------------------------------------------
def _init_conv(key, ks, cin, cout):
    kw_, kb_ = jax.random.split(key)
    fan_in = cin * ks[0] * ks[1] * ks[2]
    w = jax.random.normal(kw_, (*ks, cin, cout), jnp.float32) / jnp.sqrt(float(fan_in))
    b = 0.01 * jax.random.normal(kb_, (cout,), jnp.float32)
    return w, b


def init_params(key, in_channels=1):
    fmaps = lambda lvl: NUM_FMAPS * INC ** lvl
    params = {"l_conv": [], "r_conv": [None] * (NUM_LEVELS - 1)}
    for level in range(NUM_LEVELS):
        cin = in_channels if level == 0 else fmaps(level - 1)
        convs = []
        for ks in KS_DOWN[level]:
            key, sub = jax.random.split(key)
            convs.append(_init_conv(sub, ks, cin, fmaps(level)))
            cin = fmaps(level)
        params["l_conv"].append(convs)
    for level in range(NUM_LEVELS - 1):
        cin = fmaps(level) + fmaps(level + 1)   # skip + (constant) upsampled
        convs = []
        for ks in KS_UP[level]:
            key, sub = jax.random.split(key)
            convs.append(_init_conv(sub, ks, cin, fmaps(level)))
            cin = fmaps(level)
        params["r_conv"][level] = convs
    key, k1 = jax.random.split(key)
    key, k2 = jax.random.split(key)
    params["affs"] = _init_conv(k1, (1, 1, 1), NUM_FMAPS, AFFS_DIMS)
    params["lsds"] = _init_conv(k2, (1, 1, 1), NUM_FMAPS, LSDS_DIMS)
    return params


# ----------------------------------------------------------------------------
# Forward pass (activations are (D, C, H, W) per sample)
# ----------------------------------------------------------------------------
def unet_forward(x, params):
    cfs = crop_factors()
    skips = []
    f = x
    for level in range(NUM_LEVELS):                      # left / down path
        f = conv_pass(f, params["l_conv"][level], "relu")
        if level < NUM_LEVELS - 1:
            skips.append(f)
            f = maxpool_122(f)
    for level in reversed(range(NUM_LEVELS - 1)):        # right / up path
        g = upsample_122(f)                              # constant_upsample=True
        g = crop_to_factor(g, cfs[level], KS_UP[level])
        left = center_crop(skips[level], (g.shape[0], g.shape[2], g.shape[3]))
        f = jnp.concatenate([left, g], axis=1)           # torch.cat(dim=1)
        f = conv_pass(f, params["r_conv"][level], "relu")
    return f


def model_forward(x_ncdhw, params):
    # Fuse the two sigmoid 1x1x1 heads into a single 16-channel conv.
    wa, ba = params["affs"]
    wl, bl = params["lsds"]
    w_head = jnp.concatenate([wa, wl], axis=-1)          # (1,1,1,12,16)
    b_head = jnp.concatenate([ba, bl], axis=0)           # (16,)

    affs_out, lsds_out = [], []
    for n in range(x_ncdhw.shape[0]):                    # B = 1 here
        x = jnp.transpose(x_ncdhw[n], (1, 0, 2, 3)).astype(ACT_DTYPE)  # (D,C,H,W)
        z = unet_forward(x, params)
        heads = conv_pass(z, [(w_head, b_head)], "sigmoid").astype(jnp.float32)
        affs_out.append(jnp.transpose(heads[:, :AFFS_DIMS], (1, 0, 2, 3)))
        lsds_out.append(jnp.transpose(heads[:, AFFS_DIMS:], (1, 0, 2, 3)))
    return jnp.stack(affs_out), jnp.stack(lsds_out)


# ----------------------------------------------------------------------------
# Pure-JAX reference for self-checking the conv kernel
# ----------------------------------------------------------------------------
def _ref_conv(x, w, b, act):
    kd, kh, kw, cin, cout = w.shape
    d, c, h, wd = x.shape
    do, ho, wo = d - kd + 1, h - kh + 1, wd - kw + 1
    acc = jnp.zeros((do, cout, ho, wo), jnp.float32)
    for a in range(kd):
        for bb in range(kh):
            for cc in range(kw):
                xs = x[a:a + do, :, bb:bb + ho, cc:cc + wo]
                acc = acc + jnp.einsum("dihw,io->dohw", xs, w[a, bb, cc],
                                       precision=jax.lax.Precision.HIGHEST)
    acc = acc + b.reshape(1, cout, 1, 1)
    if act == "relu":
        acc = jnp.maximum(acc, 0.0)
    elif act == "sigmoid":
        acc = jax.nn.sigmoid(acc)
    return acc


# ----------------------------------------------------------------------------
if __name__ == "__main__":
    key = jax.random.PRNGKey(0)
    kx, kp = jax.random.split(key)

    # --- small self-checks of the two Pallas kernels against pure-JAX refs ---
    kc = jax.random.PRNGKey(42)
    k1, k2, k3 = jax.random.split(kc, 3)
    xt = jax.random.normal(k1, (7, 3, 12, 14), jnp.float32)
    w1, b1 = _init_conv(k2, (3, 3, 3), 3, 5)
    w2, b2 = _init_conv(k3, (1, 3, 3), 5, 4)
    got = jax.jit(lambda a: conv_pass(a, [(w1, b1), (w2, b2)], "relu"))(xt)
    got = got.astype(jnp.float32)
    want = _ref_conv(_ref_conv(xt, w1, b1, "relu"), w2, b2, "relu")
    assert got.shape == want.shape, (got.shape, want.shape)
    tol = 5e-4 if ACT_DTYPE == jnp.float32 else 6e-2   # bf16 wire dtype
    assert float(jnp.max(jnp.abs(got - want))) < tol

    xp = jax.random.normal(k1, (4, 8, 8, 10), jnp.float32)
    gp = jax.jit(maxpool_122)(xp)
    wp = xp.reshape(4, 8, 4, 2, 5, 2).max(axis=(3, 5))
    assert float(jnp.max(jnp.abs(gp - wp))) < 1e-6

    # --- full model (smallest convenient valid-padding input size) ---
    x = jax.random.normal(kx, (1, 1, 20, 100, 100), jnp.float32)
    params = init_params(kp, in_channels=1)

    affs, lsds = jax.jit(model_forward)(x, params)
    jax.block_until_ready((affs, lsds))

    assert affs.shape == (1, AFFS_DIMS, 4, 8, 8), affs.shape
    assert lsds.shape == (1, LSDS_DIMS, 4, 8, 8), lsds.shape
    assert bool(jnp.all(jnp.isfinite(affs))) and bool(jnp.all(jnp.isfinite(lsds)))
    assert bool(jnp.all((affs >= 0) & (affs <= 1)))   # sigmoid heads
    assert bool(jnp.all((lsds >= 0) & (lsds <= 1)))

    print("KERNEL_OK")
</pallas_src>

<mosaic_0001>
module attributes {stable_mosaic.version = 11 : i64} {
  func.func @_conv_kernel(%arg0: i32, %arg1: memref<5x5x140xbf16, #tpu.memory_space<vmem>>, %arg2: memref<9x4x5xbf16, #tpu.memory_space<vmem>>, %arg3: memref<4x1xf32, #tpu.memory_space<vmem>>, %arg4: memref<1x4x112xbf16, #tpu.memory_space<vmem>>) attributes {dimension_semantics = [#tpu.dimension_semantics<parallel>], iteration_bounds = array<i64: 5>, scalar_prefetch = 0 : i64, scratch_operands = 0 : i64, tpu.core_type = #tpu.core_type<tc>, window_params = [{pipeline_mode = #tpu.pipeline_mode<synchronous>, transform_indices = @transform_0, window_bounds = array<i64: 5, 5, 140>}, {pipeline_mode = #tpu.pipeline_mode<synchronous>, transform_indices = @transform_1, window_bounds = array<i64: 9, 4, 5>}, {pipeline_mode = #tpu.pipeline_mode<synchronous>, transform_indices = @transform_2, window_bounds = array<i64: 4, 1>}, {transform_indices = @transform_3, window_bounds = array<i64: 1, 4, 112>}]} {
    %c0 = arith.constant 0 : index
    %c0_0 = arith.constant 0 : index
    %0 = vector.load %arg3[%c0, %c0_0] : memref<4x1xf32, #tpu.memory_space<vmem>>, vector<4x1xf32>
    %c0_i32 = arith.constant 0 : i32
    %c0_i32_1 = arith.constant 0 : i32
    %1 = arith.minsi %c0_i32, %c0_i32_1 : i32
    %cst = arith.constant 0.000000e+00 : f32
    %2 = vector.broadcast %cst : f32 to vector<4x110xf32>
    %c0_i32_2 = arith.constant 0 : i32
    %3 = arith.addi %arg0, %c0_i32_2 : i32
    %c0_i32_3 = arith.constant 0 : i32
    %4 = arith.addi %1, %c0_i32_3 : i32
    %c0_i32_4 = arith.constant 0 : i32
    %5 = arith.addi %4, %c0_i32_4 : i32
    %6 = arith.index_cast %3 : i32 to index
    %c0_5 = arith.constant 0 : index
    %7 = arith.index_cast %5 : i32 to index
    %8 = vector.load %arg1[%6, %c0_5, %7] : memref<5x5x140xbf16, #tpu.memory_space<vmem>>, vector<1x5x110xbf16>
    %9 = vector.shape_cast %8 : vector<1x5x110xbf16> to vector<5x110xbf16>
    %c0_6 = arith.constant 0 : index
    %c0_7 = arith.constant 0 : index
    %c0_8 = arith.constant 0 : index
    %10 = vector.load %arg2[%c0_6, %c0_7, %c0_8] : memref<9x4x5xbf16, #tpu.memory_space<vmem>>, vector<1x4x5xbf16>
    %11 = vector.shape_cast %10 : vector<1x4x5xbf16> to vector<4x5xbf16>
    %cst_9 = arith.constant dense<0.000000e+00> : vector<4x110xf32>
    %12 = tpu.matmul %11, %9, %cst_9 {dimension_numbers = #tpu.dot_dimension_numbers<[1], [0], [0], [1], [0, 0, 1, 1], [], []>} : vector<4x5xbf16>, vector<5x110xbf16>, vector<4x110xf32> -> vector<4x110xf32>
    %13 = arith.addf %2, %12 : vector<4x110xf32>
    %c0_i32_10 = arith.constant 0 : i32
    %14 = arith.addi %arg0, %c0_i32_10 : i32
    %c0_i32_11 = arith.constant 0 : i32
    %15 = arith.addi %1, %c0_i32_11 : i32
    %c1_i32 = arith.constant 1 : i32
    %16 = arith.addi %15, %c1_i32 : i32
    %17 = arith.index_cast %14 : i32 to index
    %c0_12 = arith.constant 0 : index
    %18 = arith.index_cast %16 : i32 to index
    %19 = vector.load %arg1[%17, %c0_12, %18] : memref<5x5x140xbf16, #tpu.memory_space<vmem>>, vector<1x5x110xbf16>
    %20 = vector.shape_cast %19 : vector<1x5x110xbf16> to vector<5x110xbf16>
    %c1 = arith.constant 1 : index
    %c0_13 = arith.constant 0 : index
    %c0_14 = arith.constant 0 : index
    %21 = vector.load %arg2[%c1, %c0_13, %c0_14] : memref<9x4x5xbf16, #tpu.memory_space<vmem>>, vector<1x4x5xbf16>
    %22 = vector.shape_cast %21 : vector<1x4x5xbf16> to vector<4x5xbf16>
    %cst_15 = arith.constant dense<0.000000e+00> : vector<4x110xf32>
    %23 = tpu.matmul %22, %20, %cst_15 {dimension_numbers = #tpu.dot_dimension_numbers<[1], [0], [0], [1], [0, 0, 1, 1], [], []>} : vector<4x5xbf16>, vector<5x110xbf16>, vector<4x110xf32> -> vector<4x110xf32>
    %24 = arith.addf %13, %23 : vector<4x110xf32>
    %c0_i32_16 = arith.constant 0 : i32
    %25 = arith.addi %arg0, %c0_i32_16 : i32
    %c0_i32_17 = arith.constant 0 : i32
    %26 = arith.addi %1, %c0_i32_17 : i32
    %c2_i32 = arith.constant 2 : i32
    %27 = arith.addi %26, %c2_i32 : i32
    %28 = arith.index_cast %25 : i32 to index
    %c0_18 = arith.constant 0 : index
    %29 = arith.index_cast %27 : i32 to index
    %30 = vector.load %arg1[%28, %c0_18, %29] : memref<5x5x140xbf16, #tpu.memory_space<vmem>>, vector<1x5x110xbf16>
    %31 = vector.shape_cast %30 : vector<1x5x110xbf16> to vector<5x110xbf16>
    %c2 = arith.constant 2 : index
    %c0_19 = arith.constant 0 : index
    %c0_20 = arith.constant 0 : index
    %32 = vector.load %arg2[%c2, %c0_19, %c0_20] : memref<9x4x5xbf16, #tpu.memory_space<vmem>>, vector<1x4x5xbf16>
    %33 = vector.shape_cast %32 : vector<1x4x5xbf16> to vector<4x5xbf16>
    %cst_21 = arith.constant dense<0.000000e+00> : vector<4x110xf32>
    %34 = tpu.matmul %33, %31, %cst_21 {dimension_numbers = #tpu.dot_dimension_numbers<[1], [0], [0], [1], [0, 0, 1, 1], [], []>} : vector<4x5xbf16>, vector<5x110xbf16>, vector<4x110xf32> -> vector<4x110xf32>
    %35 = arith.addf %24, %34 : vector<4x110xf32>
    %c0_i32_22 = arith.constant 0 : i32
    %36 = arith.addi %arg0, %c0_i32_22 : i32
    %c14_i32 = arith.constant 14 : i32
    %37 = arith.addi %1, %c14_i32 : i32
    %c0_i32_23 = arith.constant 0 : i32
    %38 = arith.addi %37, %c0_i32_23 : i32
    %39 = arith.index_cast %36 : i32 to index
    %c0_24 = arith.constant 0 : index
    %40 = arith.index_cast %38 : i32 to index
    %41 = vector.load %arg1[%39, %c0_24, %40] : memref<5x5x140xbf16, #tpu.memory_space<vmem>>, vector<1x5x110xbf16>
    %42 = vector.shape_cast %41 : vector<1x5x110xbf16> to vector<5x110xbf16>
    %c3 = arith.constant 3 : index
    %c0_25 = arith.constant 0 : index
    %c0_26 = arith.constant 0 : index
    %43 = vector.load %arg2[%c3, %c0_25, %c0_26] : memref<9x4x5xbf16, #tpu.memory_space<vmem>>, vector<1x4x5xbf16>
    %44 = vector.shape_cast %43 : vector<1x4x5xbf16> to vector<4x5xbf16>
    %cst_27 = arith.constant dense<0.000000e+00> : vector<4x110xf32>
    %45 = tpu.matmul %44, %42, %cst_27 {dimension_numbers = #tpu.dot_dimension_numbers<[1], [0], [0], [1], [0, 0, 1, 1], [], []>} : vector<4x5xbf16>, vector<5x110xbf16>, vector<4x110xf32> -> vector<4x110xf32>
    %46 = arith.addf %35, %45 : vector<4x110xf32>
    %c0_i32_28 = arith.constant 0 : i32
    %47 = arith.addi %arg0, %c0_i32_28 : i32
    %c14_i32_29 = arith.constant 14 : i32
    %48 = arith.addi %1, %c14_i32_29 : i32
    %c1_i32_30 = arith.constant 1 : i32
    %49 = arith.addi %48, %c1_i32_30 : i32
    %50 = arith.index_cast %47 : i32 to index
    %c0_31 = arith.constant 0 : index
    %51 = arith.index_cast %49 : i32 to index
    %52 = vector.load %arg1[%50, %c0_31, %51] : memref<5x5x140xbf16, #tpu.memory_space<vmem>>, vector<1x5x110xbf16>
    %53 = vector.shape_cast %52 : vector<1x5x110xbf16> to vector<5x110xbf16>
    %c4 = arith.constant 4 : index
    %c0_32 = arith.constant 0 : index
    %c0_33 = arith.constant 0 : index
    %54 = vector.load %arg2[%c4, %c0_32, %c0_33] : memref<9x4x5xbf16, #tpu.memory_space<vmem>>, vector<1x4x5xbf16>
    %55 = vector.shape_cast %54 : vector<1x4x5xbf16> to vector<4x5xbf16>
    %cst_34 = arith.constant dense<0.000000e+00> : vector<4x110xf32>
    %56 = tpu.matmul %55, %53, %cst_34 {dimension_numbers = #tpu.dot_dimension_numbers<[1], [0], [0], [1], [0, 0, 1, 1], [], []>} : vector<4x5xbf16>, vector<5x110xbf16>, vector<4x110xf32> -> vector<4x110xf32>
    %57 = arith.addf %46, %56 : vector<4x110xf32>
    %c0_i32_35 = arith.constant 0 : i32
    %58 = arith.addi %arg0, %c0_i32_35 : i32
    %c14_i32_36 = arith.constant 14 : i32
    %59 = arith.addi %1, %c14_i32_36 : i32
    %c2_i32_37 = arith.constant 2 : i32
    %60 = arith.addi %59, %c2_i32_37 : i32
    %61 = arith.index_cast %58 : i32 to index
    %c0_38 = arith.constant 0 : index
    %62 = arith.index_cast %60 : i32 to index
    %63 = vector.load %arg1[%61, %c0_38, %62] : memref<5x5x140xbf16, #tpu.memory_space<vmem>>, vector<1x5x110xbf16>
    %64 = vector.shape_cast %63 : vector<1x5x110xbf16> to vector<5x110xbf16>
    %c5 = arith.constant 5 : index
    %c0_39 = arith.constant 0 : index
    %c0_40 = arith.constant 0 : index
    %65 = vector.load %arg2[%c5, %c0_39, %c0_40] : memref<9x4x5xbf16, #tpu.memory_space<vmem>>, vector<1x4x5xbf16>
    %66 = vector.shape_cast %65 : vector<1x4x5xbf16> to vector<4x5xbf16>
    %cst_41 = arith.constant dense<0.000000e+00> : vector<4x110xf32>
    %67 = tpu.matmul %66, %64, %cst_41 {dimension_numbers = #tpu.dot_dimension_numbers<[1], [0], [0], [1], [0, 0, 1, 1], [], []>} : vector<4x5xbf16>, vector<5x110xbf16>, vector<4x110xf32> -> vector<4x110xf32>
    %68 = arith.addf %57, %67 : vector<4x110xf32>
    %c0_i32_42 = arith.constant 0 : i32
    %69 = arith.addi %arg0, %c0_i32_42 : i32
    %c28_i32 = arith.constant 28 : i32
    %70 = arith.addi %1, %c28_i32 : i32
    %c0_i32_43 = arith.constant 0 : i32
    %71 = arith.addi %70, %c0_i32_43 : i32
    %72 = arith.index_cast %69 : i32 to index
    %c0_44 = arith.constant 0 : index
    %73 = arith.index_cast %71 : i32 to index
    %74 = vector.load %arg1[%72, %c0_44, %73] : memref<5x5x140xbf16, #tpu.memory_space<vmem>>, vector<1x5x110xbf16>
    %75 = vector.shape_cast %74 : vector<1x5x110xbf16> to vector<5x110xbf16>
    %c6 = arith.constant 6 : index
    %c0_45 = arith.constant 0 : index
    %c0_46 = arith.constant 0 : index
    %76 = vector.load %arg2[%c6, %c0_45, %c0_46] : memref<9x4x5xbf16, #tpu.memory_space<vmem>>, vector<1x4x5xbf16>
    %77 = vector.shape_cast %76 : vector<1x4x5xbf16> to vector<4x5xbf16>
    %cst_47 = arith.constant dense<0.000000e+00> : vector<4x110xf32>
    %78 = tpu.matmul %77, %75, %cst_47 {dimension_numbers = #tpu.dot_dimension_numbers<[1], [0], [0], [1], [0, 0, 1, 1], [], []>} : vector<4x5xbf16>, vector<5x110xbf16>, vector<4x110xf32> -> vector<4x110xf32>
    %79 = arith.addf %68, %78 : vector<4x110xf32>
    %c0_i32_48 = arith.constant 0 : i32
    %80 = arith.addi %arg0, %c0_i32_48 : i32
    %c28_i32_49 = arith.constant 28 : i32
    %81 = arith.addi %1, %c28_i32_49 : i32
    %c1_i32_50 = arith.constant 1 : i32
    %82 = arith.addi %81, %c1_i32_50 : i32
    %83 = arith.index_cast %80 : i32 to index
    %c0_51 = arith.constant 0 : index
    %84 = arith.index_cast %82 : i32 to index
    %85 = vector.load %arg1[%83, %c0_51, %84] : memref<5x5x140xbf16, #tpu.memory_space<vmem>>, vector<1x5x110xbf16>
    %86 = vector.shape_cast %85 : vector<1x5x110xbf16> to vector<5x110xbf16>
    %c7 = arith.constant 7 : index
    %c0_52 = arith.constant 0 : index
    %c0_53 = arith.constant 0 : index
    %87 = vector.load %arg2[%c7, %c0_52, %c0_53] : memref<9x4x5xbf16, #tpu.memory_space<vmem>>, vector<1x4x5xbf16>
    %88 = vector.shape_cast %87 : vector<1x4x5xbf16> to vector<4x5xbf16>
    %cst_54 = arith.constant dense<0.000000e+00> : vector<4x110xf32>
    %89 = tpu.matmul %88, %86, %cst_54 {dimension_numbers = #tpu.dot_dimension_numbers<[1], [0], [0], [1], [0, 0, 1, 1], [], []>} : vector<4x5xbf16>, vector<5x110xbf16>, vector<4x110xf32> -> vector<4x110xf32>
    %90 = arith.addf %79, %89 : vector<4x110xf32>
    %c0_i32_55 = arith.constant 0 : i32
    %91 = arith.addi %arg0, %c0_i32_55 : i32
    %c28_i32_56 = arith.constant 28 : i32
    %92 = arith.addi %1, %c28_i32_56 : i32
    %c2_i32_57 = arith.constant 2 : i32
    %93 = arith.addi %92, %c2_i32_57 : i32
    %94 = arith.index_cast %91 : i32 to index
    %c0_58 = arith.constant 0 : index
    %95 = arith.index_cast %93 : i32 to index
    %96 = vector.load %arg1[%94, %c0_58, %95] : memref<5x5x140xbf16, #tpu.memory_space<vmem>>, vector<1x5x110xbf16>
    %97 = vector.shape_cast %96 : vector<1x5x110xbf16> to vector<5x110xbf16>
    %c8 = arith.constant 8 : index
    %c0_59 = arith.constant 0 : index
    %c0_60 = arith.constant 0 : index
    %98 = vector.load %arg2[%c8, %c0_59, %c0_60] : memref<9x4x5xbf16, #tpu.memory_space<vmem>>, vector<1x4x5xbf16>
    %99 = vector.shape_cast %98 : vector<1x4x5xbf16> to vector<4x5xbf16>
    %cst_61 = arith.constant dense<0.000000e+00> : vector<4x110xf32>
    %100 = tpu.matmul %99, %97, %cst_61 {dimension_numbers = #tpu.dot_dimension_numbers<[1], [0], [0], [1], [0, 0, 1, 1], [], []>} : vector<4x5xbf16>, vector<5x110xbf16>, vector<4x110xf32> -> vector<4x110xf32>
    %101 = arith.addf %90, %100 : vector<4x110xf32>
    %102 = vector.broadcast %0 : vector<4x1xf32> to vector<4x110xf32>
    %103 = arith.addf %101, %102 : vector<4x110xf32>
    %cst_62 = arith.constant 0.000000e+00 : f32
    %104 = vector.broadcast %cst_62 : f32 to vector<4x110xf32>
    %105 = arith.maximumf %103, %104 : vector<4x110xf32>
    %106 = vector.shape_cast %105 : vector<4x110xf32> to vector<1x4x110xf32>
    %107 = arith.truncf %106 : vector<1x4x110xf32> to vector<1x4x110xbf16>
    %c0_63 = arith.constant 0 : index
    %c0_64 = arith.constant 0 : index
    %108 = arith.index_cast %1 : i32 to index
    %109 = vector.load %arg4[%c0_63, %c0_64, %108] : memref<1x4x112xbf16, #tpu.memory_space<vmem>>, vector<1x4x110xbf16>
    tpu.vector_store %arg4[%c0_63, %c0_64, %108], %107 {strides = array<i32>} : memref<1x4x112xbf16, #tpu.memory_space<vmem>>, vector<1x4x110xbf16>,
    %cst_65 = arith.constant 0.000000e+00 : bf16
    %110 = vector.broadcast %cst_65 : bf16 to vector<1x4x2xbf16>
    %c0_66 = arith.constant 0 : index
    %c0_67 = arith.constant 0 : index
    %c110 = arith.constant 110 : index
    %111 = vector.load %arg4[%c0_66, %c0_67, %c110] : memref<1x4x112xbf16, #tpu.memory_space<vmem>>, vector<1x4x2xbf16>
    tpu.vector_store %arg4[%c0_66, %c0_67, %c110], %110 {strides = array<i32>} : memref<1x4x112xbf16, #tpu.memory_space<vmem>>, vector<1x4x2xbf16>,
    return
  }
  func.func @transform_0(%arg0: i32) -> (i32, i32, i32) {
    %c0_i32 = arith.constant 0 : i32
    %c0_i32_0 = arith.constant 0 : i32
    %c0_i32_1 = arith.constant 0 : i32
    %c0_i32_2 = arith.constant 0 : i32
    return %c0_i32, %c0_i32_0, %c0_i32_1 : i32, i32, i32
  }
  func.func @transform_1(%arg0: i32) -> (i32, i32, i32) {
    %c0_i32 = arith.constant 0 : i32
    %c0_i32_0 = arith.constant 0 : i32
    %c0_i32_1 = arith.constant 0 : i32
    %c0_i32_2 = arith.constant 0 : i32
    return %c0_i32, %c0_i32_0, %c0_i32_1 : i32, i32, i32
  }
  func.func @transform_2(%arg0: i32) -> (i32, i32) {
    %c0_i32 = arith.constant 0 : i32
    %c0_i32_0 = arith.constant 0 : i32
    %c0_i32_1 = arith.constant 0 : i32
    return %c0_i32, %c0_i32_0 : i32, i32
  }
  func.func @transform_3(%arg0: i32) -> (i32, i32, i32) {
    %c0_i32 = arith.constant 0 : i32
    %c0_i32_0 = arith.constant 0 : i32
    %c0_i32_1 = arith.constant 0 : i32
    return %arg0, %c0_i32, %c0_i32_0 : i32, i32, i32
  }
}

module attributes {stable_mosaic.version = 11 : i64} {
  func.func @_conv_kernel(%arg0: i32, %arg1: memref<7x3x168xbf16, #tpu.memory_space<vmem>>, %arg2: memref<27x5x3xbf16, #tpu.memory_space<vmem>>, %arg3: memref<5x1xf32, #tpu.memory_space<vmem>>, %arg4: memref<1x5x140xbf16, #tpu.memory_space<vmem>>) attributes {dimension_semantics = [#tpu.dimension_semantics<parallel>], iteration_bounds = array<i64: 5>, scalar_prefetch = 0 : i64, scratch_operands = 0 : i64, tpu.core_type = #tpu.core_type<tc>, window_params = [{pipeline_mode = #tpu.pipeline_mode<synchronous>, transform_indices = @transform_0, window_bounds = array<i64: 7, 3, 168>}, {pipeline_mode = #tpu.pipeline_mode<synchronous>, transform_indices = @transform_1, window_bounds = array<i64: 27, 5, 3>}, {pipeline_mode = #tpu.pipeline_mode<synchronous>, transform_indices = @transform_2, window_bounds = array<i64: 5, 1>}, {transform_indices = @transform_3, window_bounds = array<i64: 1, 5, 140>}]} {
    %c0 = arith.constant 0 : index
    %c0_0 = arith.constant 0 : index
    %0 = vector.load %arg3[%c0, %c0_0] : memref<5x1xf32, #tpu.memory_space<vmem>>, vector<5x1xf32>
    %c0_i32 = arith.constant 0 : i32
    %c0_i32_1 = arith.constant 0 : i32
    %1 = arith.minsi %c0_i32, %c0_i32_1 : i32
    %cst = arith.constant 0.000000e+00 : f32
    %2 = vector.broadcast %cst : f32 to vector<5x138xf32>
    %c0_i32_2 = arith.constant 0 : i32
    %3 = arith.addi %arg0, %c0_i32_2 : i32
    %c0_i32_3 = arith.constant 0 : i32
    %4 = arith.addi %1, %c0_i32_3 : i32
    %c0_i32_4 = arith.constant 0 : i32
    %5 = arith.addi %4, %c0_i32_4 : i32
    %6 = arith.index_cast %3 : i32 to index
    %c0_5 = arith.constant 0 : index
    %7 = arith.index_cast %5 : i32 to index
    %8 = vector.load %arg1[%6, %c0_5, %7] : memref<7x3x168xbf16, #tpu.memory_space<vmem>>, vector<1x3x138xbf16>
    %9 = vector.shape_cast %8 : vector<1x3x138xbf16> to vector<3x138xbf16>
    %c0_6 = arith.constant 0 : index
    %c0_7 = arith.constant 0 : index
    %c0_8 = arith.constant 0 : index
    %10 = vector.load %arg2[%c0_6, %c0_7, %c0_8] : memref<27x5x3xbf16, #tpu.memory_space<vmem>>, vector<1x5x3xbf16>
    %11 = vector.shape_cast %10 : vector<1x5x3xbf16> to vector<5x3xbf16>
    %cst_9 = arith.constant dense<0.000000e+00> : vector<5x138xf32>
    %12 = tpu.matmul %11, %9, %cst_9 {dimension_numbers = #tpu.dot_dimension_numbers<[1], [0], [0], [1], [0, 0, 1, 1], [], []>} : vector<5x3xbf16>, vector<3x138xbf16>, vector<5x138xf32> -> vector<5x138xf32>
    %13 = arith.addf %2, %12 : vector<5x138xf32>
    %c0_i32_10 = arith.constant 0 : i32
    %14 = arith.addi %arg0, %c0_i32_10 : i32
    %c0_i32_11 = arith.constant 0 : i32
    %15 = arith.addi %1, %c0_i32_11 : i32
    %c1_i32 = arith.constant 1 : i32
    %16 = arith.addi %15, %c1_i32 : i32
    %17 = arith.index_cast %14 : i32 to index
    %c0_12 = arith.constant 0 : index
    %18 = arith.index_cast %16 : i32 to index
    %19 = vector.load %arg1[%17, %c0_12, %18] : memref<7x3x168xbf16, #tpu.memory_space<vmem>>, vector<1x3x138xbf16>
    %20 = vector.shape_cast %19 : vector<1x3x138xbf16> to vector<3x138xbf16>
    %c1 = arith.constant 1 : index
    %c0_13 = arith.constant 0 : index
    %c0_14 = arith.constant 0 : index
    %21 = vector.load %arg2[%c1, %c0_13, %c0_14] : memref<27x5x3xbf16, #tpu.memory_space<vmem>>, vector<1x5x3xbf16>
    %22 = vector.shape_cast %21 : vector<1x5x3xbf16> to vector<5x3xbf16>
    %cst_15 = arith.constant dense<0.000000e+00> : vector<5x138xf32>
    %23 = tpu.matmul %22, %20, %cst_15 {dimension_numbers = #tpu.dot_dimension_numbers<[1], [0], [0], [1], [0, 0, 1, 1], [], []>} : vector<5x3xbf16>, vector<3x138xbf16>, vector<5x138xf32> -> vector<5x138xf32>
    %24 = arith.addf %13, %23 : vector<5x138xf32>
    %c0_i32_16 = arith.constant 0 : i32
    %25 = arith.addi %arg0, %c0_i32_16 : i32
    %c0_i32_17 = arith.constant 0 : i32
    %26 = arith.addi %1, %c0_i32_17 : i32
    %c2_i32 = arith.constant 2 : i32
    %27 = arith.addi %26, %c2_i32 : i32
    %28 = arith.index_cast %25 : i32 to index
    %c0_18 = arith.constant 0 : index
    %29 = arith.index_cast %27 : i32 to index
    %30 = vector.load %arg1[%28, %c0_18, %29] : memref<7x3x168xbf16, #tpu.memory_space<vmem>>, vector<1x3x138xbf16>
    %31 = vector.shape_cast %30 : vector<1x3x138xbf16> to vector<3x138xbf16>
    %c2 = arith.constant 2 : index
    %c0_19 = arith.constant 0 : index
    %c0_20 = arith.constant 0 : index
    %32 = vector.load %arg2[%c2, %c0_19, %c0_20] : memref<27x5x3xbf16, #tpu.memory_space<vmem>>, vector<1x5x3xbf16>
    %33 = vector.shape_cast %32 : vector<1x5x3xbf16> to vector<5x3xbf16>
    %cst_21 = arith.constant dense<0.000000e+00> : vector<5x138xf32>
    %34 = tpu.matmul %33, %31, %cst_21 {dimension_numbers = #tpu.dot_dimension_numbers<[1], [0], [0], [1], [0, 0, 1, 1], [], []>} : vector<5x3xbf16>, vector<3x138xbf16>, vector<5x138xf32> -> vector<5x138xf32>
    %35 = arith.addf %24, %34 : vector<5x138xf32>
    %c0_i32_22 = arith.constant 0 : i32
    %36 = arith.addi %arg0, %c0_i32_22 : i32
    %c14_i32 = arith.constant 14 : i32
    %37 = arith.addi %1, %c14_i32 : i32
    %c0_i32_23 = arith.constant 0 : i32
    %38 = arith.addi %37, %c0_i32_23 : i32
    %39 = arith.index_cast %36 : i32 to index
    %c0_24 = arith.constant 0 : index
    %40 = arith.index_cast %38 : i32 to index
    %41 = vector.load %arg1[%39, %c0_24, %40] : memref<7x3x168xbf16, #tpu.memory_space<vmem>>, vector<1x3x138xbf16>
    %42 = vector.shape_cast %41 : vector<1x3x138xbf16> to vector<3x138xbf16>
    %c3 = arith.constant 3 : index
    %c0_25 = arith.constant 0 : index
    %c0_26 = arith.constant 0 : index
    %43 = vector.load %arg2[%c3, %c0_25, %c0_26] : memref<27x5x3xbf16, #tpu.memory_space<vmem>>, vector<1x5x3xbf16>
    %44 = vector.shape_cast %43 : vector<1x5x3xbf16> to vector<5x3xbf16>
    %cst_27 = arith.constant dense<0.000000e+00> : vector<5x138xf32>
    %45 = tpu.matmul %44, %42, %cst_27 {dimension_numbers = #tpu.dot_dimension_numbers<[1], [0], [0], [1], [0, 0, 1, 1], [], []>} : vector<5x3xbf16>, vector<3x138xbf16>, vector<5x138xf32> -> vector<5x138xf32>
    %46 = arith.addf %35, %45 : vector<5x138xf32>
    %c0_i32_28 = arith.constant 0 : i32
    %47 = arith.addi %arg0, %c0_i32_28 : i32
    %c14_i32_29 = arith.constant 14 : i32
    %48 = arith.addi %1, %c14_i32_29 : i32
    %c1_i32_30 = arith.constant 1 : i32
    %49 = arith.addi %48, %c1_i32_30 : i32
    %50 = arith.index_cast %47 : i32 to index
    %c0_31 = arith.constant 0 : index
    %51 = arith.index_cast %49 : i32 to index
    %52 = vector.load %arg1[%50, %c0_31, %51] : memref<7x3x168xbf16, #tpu.memory_space<vmem>>, vector<1x3x138xbf16>
    %53 = vector.shape_cast %52 : vector<1x3x138xbf16> to vector<3x138xbf16>
    %c4 = arith.constant 4 : index
    %c0_32 = arith.constant 0 : index
    %c0_33 = arith.constant 0 : index
    %54 = vector.load %arg2[%c4, %c0_32, %c0_33] : memref<27x5x3xbf16, #tpu.memory_space<vmem>>, vector<1x5x3xbf16>
    %55 = vector.shape_cast %54 : vector<1x5x3xbf16> to vector<5x3xbf16>
    %cst_34 = arith.constant dense<0.000000e+00> : vector<5x138xf32>
    %56 = tpu.matmul %55, %53, %cst_34 {dimension_numbers = #tpu.dot_dimension_numbers<[1], [0], [0], [1], [0, 0, 1, 1], [], []>} : vector<5x3xbf16>, vector<3x138xbf16>, vector<5x138xf32> -> vector<5x138xf32>
    %57 = arith.addf %46, %56 : vector<5x138xf32>
    %c0_i32_35 = arith.constant 0 : i32
    %58 = arith.addi %arg0, %c0_i32_35 : i32
    %c14_i32_36 = arith.constant 14 : i32
    %59 = arith.addi %1, %c14_i32_36 : i32
    %c2_i32_37 = arith.constant 2 : i32
    %60 = arith.addi %59, %c2_i32_37 : i32
    %61 = arith.index_cast %58 : i32 to index
    %c0_38 = arith.constant 0 : index
    %62 = arith.index_cast %60 : i32 to index
    %63 = vector.load %arg1[%61, %c0_38, %62] : memref<7x3x168xbf16, #tpu.memory_space<vmem>>, vector<1x3x138xbf16>
    %64 = vector.shape_cast %63 : vector<1x3x138xbf16> to vector<3x138xbf16>
    %c5 = arith.constant 5 : index
    %c0_39 = arith.constant 0 : index
    %c0_40 = arith.constant 0 : index
    %65 = vector.load %arg2[%c5, %c0_39, %c0_40] : memref<27x5x3xbf16, #tpu.memory_space<vmem>>, vector<1x5x3xbf16>
    %66 = vector.shape_cast %65 : vector<1x5x3xbf16> to vector<5x3xbf16>
    %cst_41 = arith.constant dense<0.000000e+00> : vector<5x138xf32>
    %67 = tpu.matmul %66, %64, %cst_41 {dimension_numbers = #tpu.dot_dimension_numbers<[1], [0], [0], [1], [0, 0, 1, 1], [], []>} : vector<5x3xbf16>, vector<3x138xbf16>, vector<5x138xf32> -> vector<5x138xf32>
    %68 = arith.addf %57, %67 : vector<5x138xf32>
    %c0_i32_42 = arith.constant 0 : i32
    %69 = arith.addi %arg0, %c0_i32_42 : i32
    %c28_i32 = arith.constant 28 : i32
    %70 = arith.addi %1, %c28_i32 : i32
    %c0_i32_43 = arith.constant 0 : i32
    %71 = arith.addi %70, %c0_i32_43 : i32
    %72 = arith.index_cast %69 : i32 to index
    %c0_44 = arith.constant 0 : index
    %73 = arith.index_cast %71 : i32 to index
    %74 = vector.load %arg1[%72, %c0_44, %73] : memref<7x3x168xbf16, #tpu.memory_space<vmem>>, vector<1x3x138xbf16>
    %75 = vector.shape_cast %74 : vector<1x3x138xbf16> to vector<3x138xbf16>
    %c6 = arith.constant 6 : index
    %c0_45 = arith.constant 0 : index
    %c0_46 = arith.constant 0 : index
    %76 = vector.load %arg2[%c6, %c0_45, %c0_46] : memref<27x5x3xbf16, #tpu.memory_space<vmem>>, vector<1x5x3xbf16>
    %77 = vector.shape_cast %76 : vector<1x5x3xbf16> to vector<5x3xbf16>
    %cst_47 = arith.constant dense<0.000000e+00> : vector<5x138xf32>
    %78 = tpu.matmul %77, %75, %cst_47 {dimension_numbers = #tpu.dot_dimension_numbers<[1], [0], [0], [1], [0, 0, 1, 1], [], []>} : vector<5x3xbf16>, vector<3x138xbf16>, vector<5x138xf32> -> vector<5x138xf32>
    %79 = arith.addf %68, %78 : vector<5x138xf32>
    %c0_i32_48 = arith.constant 0 : i32
    %80 = arith.addi %arg0, %c0_i32_48 : i32
    %c28_i32_49 = arith.constant 28 : i32
    %81 = arith.addi %1, %c28_i32_49 : i32
    %c1_i32_50 = arith.constant 1 : i32
    %82 = arith.addi %81, %c1_i32_50 : i32
    %83 = arith.index_cast %80 : i32 to index
    %c0_51 = arith.constant 0 : index
    %84 = arith.index_cast %82 : i32 to index
    %85 = vector.load %arg1[%83, %c0_51, %84] : memref<7x3x168xbf16, #tpu.memory_space<vmem>>, vector<1x3x138xbf16>
    %86 = vector.shape_cast %85 : vector<1x3x138xbf16> to vector<3x138xbf16>
    %c7 = arith.constant 7 : index
    %c0_52 = arith.constant 0 : index
    %c0_53 = arith.constant 0 : index
    %87 = vector.load %arg2[%c7, %c0_52, %c0_53] : memref<27x5x3xbf16, #tpu.memory_space<vmem>>, vector<1x5x3xbf16>
    %88 = vector.shape_cast %87 : vector<1x5x3xbf16> to vector<5x3xbf16>
    %cst_54 = arith.constant dense<0.000000e+00> : vector<5x138xf32>
    %89 = tpu.matmul %88, %86, %cst_54 {dimension_numbers = #tpu.dot_dimension_numbers<[1], [0], [0], [1], [0, 0, 1, 1], [], []>} : vector<5x3xbf16>, vector<3x138xbf16>, vector<5x138xf32> -> vector<5x138xf32>
    %90 = arith.addf %79, %89 : vector<5x138xf32>
    %c0_i32_55 = arith.constant 0 : i32
    %91 = arith.addi %arg0, %c0_i32_55 : i32
    %c28_i32_56 = arith.constant 28 : i32
    %92 = arith.addi %1, %c28_i32_56 : i32
    %c2_i32_57 = arith.constant 2 : i32
    %93 = arith.addi %92, %c2_i32_57 : i32
    %94 = arith.index_cast %91 : i32 to index
    %c0_58 = arith.constant 0 : index
    %95 = arith.index_cast %93 : i32 to index
    %96 = vector.load %arg1[%94, %c0_58, %95] : memref<7x3x168xbf16, #tpu.memory_space<vmem>>, vector<1x3x138xbf16>
    %97 = vector.shape_cast %96 : vector<1x3x138xbf16> to vector<3x138xbf16>
    %c8 = arith.constant 8 : index
    %c0_59 = arith.constant 0 : index
    %c0_60 = arith.constant 0 : index
    %98 = vector.load %arg2[%c8, %c0_59, %c0_60] : memref<27x5x3xbf16, #tpu.memory_space<vmem>>, vector<1x5x3xbf16>
    %99 = vector.shape_cast %98 : vector<1x5x3xbf16> to vector<5x3xbf16>
    %cst_61 = arith.constant dense<0.000000e+00> : vector<5x138xf32>
    %100 = tpu.matmul %99, %97, %cst_61 {dimension_numbers = #tpu.dot_dimension_numbers<[1], [0], [0], [1], [0, 0, 1, 1], [], []>} : vector<5x3xbf16>, vector<3x138xbf16>, vector<5x138xf32> -> vector<5x138xf32>
    %101 = arith.addf %90, %100 : vector<5x138xf32>
    %c1_i32_62 = arith.constant 1 : i32
    %102 = arith.addi %arg0, %c1_i32_62 : i32
    %c0_i32_63 = arith.constant 0 : i32
    %103 = arith.addi %1, %c0_i32_63 : i32
    %c0_i32_64 = arith.constant 0 : i32
    %104 = arith.addi %103, %c0_i32_64 : i32
    %105 = arith.index_cast %102 : i32 to index
    %c0_65 = arith.constant 0 : index
    %106 = arith.index_cast %104 : i32 to index
    %107 = vector.load %arg1[%105, %c0_65, %106] : memref<7x3x168xbf16, #tpu.memory_space<vmem>>, vector<1x3x138xbf16>
    %108 = vector.shape_cast %107 : vector<1x3x138xbf16> to vector<3x138xbf16>
    %c9 = arith.constant 9 : index
    %c0_66 = arith.constant 0 : index
    %c0_67 = arith.constant 0 : index
    %109 = vector.load %arg2[%c9, %c0_66, %c0_67] : memref<27x5x3xbf16, #tpu.memory_space<vmem>>, vector<1x5x3xbf16>
    %110 = vector.shape_cast %109 : vector<1x5x3xbf16> to vector<5x3xbf16>
    %cst_68 = arith.constant dense<0.000000e+00> : vector<5x138xf32>
    %111 = tpu.matmul %110, %108, %cst_68 {dimension_numbers = #tpu.dot_dimension_numbers<[1], [0], [0], [1], [0, 0, 1, 1], [], []>} : vector<5x3xbf16>, vector<3x138xbf16>, vector<5x138xf32> -> vector<5x138xf32>
    %112 = arith.addf %101, %111 : vector<5x138xf32>
    %c1_i32_69 = arith.constant 1 : i32
    %113 = arith.addi %arg0, %c1_i32_69 : i32
    %c0_i32_70 = arith.constant 0 : i32
    %114 = arith.addi %1, %c0_i32_70 : i32
    %c1_i32_71 = arith.constant 1 : i32
    %115 = arith.addi %114, %c1_i32_71 : i32
    %116 = arith.index_cast %113 : i32 to index
    %c0_72 = arith.constant 0 : index
    %117 = arith.index_cast %115 : i32 to index
    %118 = vector.load %arg1[%116, %c0_72, %117] : memref<7x3x168xbf16, #tpu.memory_space<vmem>>, vector<1x3x138xbf16>
    %119 = vector.shape_cast %118 : vector<1x3x138xbf16> to vector<3x138xbf16>
    %c10 = arith.constant 10 : index
    %c0_73 = arith.constant 0 : index
    %c0_74 = arith.constant 0 : index
    %120 = vector.load %arg2[%c10, %c0_73, %c0_74] : memref<27x5x3xbf16, #tpu.memory_space<vmem>>, vector<1x5x3xbf16>
    %121 = vector.shape_cast %120 : vector<1x5x3xbf16> to vector<5x3xbf16>
    %cst_75 = arith.constant dense<0.000000e+00> : vector<5x138xf32>
    %122 = tpu.matmul %121, %119, %cst_75 {dimension_numbers = #tpu.dot_dimension_numbers<[1], [0], [0], [1], [0, 0, 1, 1], [], []>} : vector<5x3xbf16>, vector<3x138xbf16>, vector<5x138xf32> -> vector<5x138xf32>
    %123 = arith.addf %112, %122 : vector<5x138xf32>
    %c1_i32_76 = arith.constant 1 : i32
    %124 = arith.addi %arg0, %c1_i32_76 : i32
    %c0_i32_77 = arith.constant 0 : i32
    %125 = arith.addi %1, %c0_i32_77 : i32
    %c2_i32_78 = arith.constant 2 : i32
    %126 = arith.addi %125, %c2_i32_78 : i32
    %127 = arith.index_cast %124 : i32 to index
    %c0_79 = arith.constant 0 : index
    %128 = arith.index_cast %126 : i32 to index
    %129 = vector.load %arg1[%127, %c0_79, %128] : memref<7x3x168xbf16, #tpu.memory_space<vmem>>, vector<1x3x138xbf16>
    %130 = vector.shape_cast %129 : vector<1x3x138xbf16> to vector<3x138xbf16>
    %c11 = arith.constant 11 : index
    %c0_80 = arith.constant 0 : index
    %c0_81 = arith.constant 0 : index
    %131 = vector.load %arg2[%c11, %c0_80, %c0_81] : memref<27x5x3xbf16, #tpu.memory_space<vmem>>, vector<1x5x3xbf16>
    %132 = vector.shape_cast %131 : vector<1x5x3xbf16> to vector<5x3xbf16>
    %cst_82 = arith.constant dense<0.000000e+00> : vector<5x138xf32>
    %133 = tpu.matmul %132, %130, %cst_82 {dimension_numbers = #tpu.dot_dimension_numbers<[1], [0], [0], [1], [0, 0, 1, 1], [], []>} : vector<5x3xbf16>, vector<3x138xbf16>, vector<5x138xf32> -> vector<5x138xf32>
    %134 = arith.addf %123, %133 : vector<5x138xf32>
    %c1_i32_83 = arith.constant 1 : i32
    %135 = arith.addi %arg0, %c1_i32_83 : i32
    %c14_i32_84 = arith.constant 14 : i32
    %136 = arith.addi %1, %c14_i32_84 : i32
    %c0_i32_85 = arith.constant 0 : i32
    %137 = arith.addi %136, %c0_i32_85 : i32
    %138 = arith.index_cast %135 : i32 to index
    %c0_86 = arith.constant 0 : index
    %139 = arith.index_cast %137 : i32 to index
    %140 = vector.load %arg1[%138, %c0_86, %139] : memref<7x3x168xbf16, #tpu.memory_space<vmem>>, vector<1x3x138xbf16>
    %141 = vector.shape_cast %140 : vector<1x3x138xbf16> to vector<3x138xbf16>
    %c12 = arith.constant 12 : index
    %c0_87 = arith.constant 0 : index
    %c0_88 = arith.constant 0 : index
    %142 = vector.load %arg2[%c12, %c0_87, %c0_88] : memref<27x5x3xbf16, #tpu.memory_space<vmem>>, vector<1x5x3xbf16>
    %143 = vector.shape_cast %142 : vector<1x5x3xbf16> to vector<5x3xbf16>
    %cst_89 = arith.constant dense<0.000000e+00> : vector<5x138xf32>
    %144 = tpu.matmul %143, %141, %cst_89 {dimension_numbers = #tpu.dot_dimension_numbers<[1], [0], [0], [1], [0, 0, 1, 1], [], []>} : vector<5x3xbf16>, vector<3x138xbf16>, vector<5x138xf32> -> vector<5x138xf32>
    %145 = arith.addf %134, %144 : vector<5x138xf32>
    %c1_i32_90 = arith.constant 1 : i32
    %146 = arith.addi %arg0, %c1_i32_90 : i32
    %c14_i32_91 = arith.constant 14 : i32
    %147 = arith.addi %1, %c14_i32_91 : i32
    %c1_i32_92 = arith.constant 1 : i32
    %148 = arith.addi %147, %c1_i32_92 : i32
    %149 = arith.index_cast %146 : i32 to index
    %c0_93 = arith.constant 0 : index
    %150 = arith.index_cast %148 : i32 to index
    %151 = vector.load %arg1[%149, %c0_93, %150] : memref<7x3x168xbf16, #tpu.memory_space<vmem>>, vector<1x3x138xbf16>
    %152 = vector.shape_cast %151 : vector<1x3x138xbf16> to vector<3x138xbf16>
    %c13 = arith.constant 13 : index
    %c0_94 = arith.constant 0 : index
    %c0_95 = arith.constant 0 : index
    %153 = vector.load %arg2[%c13, %c0_94, %c0_95] : memref<27x5x3xbf16, #tpu.memory_space<vmem>>, vector<1x5x3xbf16>
    %154 = vector.shape_cast %153 : vector<1x5x3xbf16> to vector<5x3xbf16>
    %cst_96 = arith.constant dense<0.000000e+00> : vector<5x138xf32>
    %155 = tpu.matmul %154, %152, %cst_96 {dimension_numbers = #tpu.dot_dimension_numbers<[1], [0], [0], [1], [0, 0, 1, 1], [], []>} : vector<5x3xbf16>, vector<3x138xbf16>, vector<5x138xf32> -> vector<5x138xf32>
    %156 = arith.addf %145, %155 : vector<5x138xf32>
    %c1_i32_97 = arith.constant 1 : i32
    %157 = arith.addi %arg0, %c1_i32_97 : i32
    %c14_i32_98 = arith.constant 14 : i32
    %158 = arith.addi %1, %c14_i32_98 : i32
    %c2_i32_99 = arith.constant 2 : i32
    %159 = arith.addi %158, %c2_i32_99 : i32
    %160 = arith.index_cast %157 : i32 to index
    %c0_100 = arith.constant 0 : index
    %161 = arith.index_cast %159 : i32 to index
    %162 = vector.load %arg1[%160, %c0_100, %161] : memref<7x3x168xbf16, #tpu.memory_space<vmem>>, vector<1x3x138xbf16>
    %163 = vector.shape_cast %162 : vector<1x3x138xbf16> to vector<3x138xbf16>
    %c14 = arith.constant 14 : index
    %c0_101 = arith.constant 0 : index
    %c0_102 = arith.constant 0 : index
    %164 = vector.load %arg2[%c14, %c0_101, %c0_102] : memref<27x5x3xbf16, #tpu.memory_space<vmem>>, vector<1x5x3xbf16>
    %165 = vector.shape_cast %164 : vector<1x5x3xbf16> to vector<5x3xbf16>
    %cst_103 = arith.constant dense<0.000000e+00> : vector<5x138xf32>
    %166 = tpu.matmul %165, %163, %cst_103 {dimension_numbers = #tpu.dot_dimension_numbers<[1], [0], [0], [1], [0, 0, 1, 1], [], []>} : vector<5x3xbf16>, vector<3x138xbf16>, vector<5x138xf32> -> vector<5x138xf32>
    %167 = arith.addf %156, %166 : vector<5x138xf32>
    %c1_i32_104 = arith.constant 1 : i32
    %168 = arith.addi %arg0, %c1_i32_104 : i32
    %c28_i32_105 = arith.constant 28 : i32
    %169 = arith.addi %1, %c28_i32_105 : i32
    %c0_i32_106 = arith.constant 0 : i32
    %170 = arith.addi %169, %c0_i32_106 : i32
    %171 = arith.index_cast %168 : i32 to index
    %c0_107 = arith.constant 0 : index
    %172 = arith.index_cast %170 : i32 to index
    %173 = vector.load %arg1[%171, %c0_107, %172] : memref<7x3x168xbf16, #tpu.memory_space<vmem>>, vector<1x3x138xbf16>
    %174 = vector.shape_cast %173 : vector<1x3x138xbf16> to vector<3x138xbf16>
    %c15 = arith.constant 15 : index
    %c0_108 = arith.constant 0 : index
    %c0_109 = arith.constant 0 : index
    %175 = vector.load %arg2[%c15, %c0_108, %c0_109] : memref<27x5x3xbf16, #tpu.memory_space<vmem>>, vector<1x5x3xbf16>
    %176 = vector.shape_cast %175 : vector<1x5x3xbf16> to vector<5x3xbf16>
    %cst_110 = arith.constant dense<0.000000e+00> : vector<5x138xf32>
    %177 = tpu.matmul %176, %174, %cst_110 {dimension_numbers = #tpu.dot_dimension_numbers<[1], [0], [0], [1], [0, 0, 1, 1], [], []>} : vector<5x3xbf16>, vector<3x138xbf16>, vector<5x138xf32> -> vector<5x138xf32>
    %178 = arith.addf %167, %177 : vector<5x138xf32>
    %c1_i32_111 = arith.constant 1 : i32
    %179 = arith.addi %arg0, %c1_i32_111 : i32
    %c28_i32_112 = arith.constant 28 : i32
    %180 = arith.addi %1, %c28_i32_112 : i32
    %c1_i32_113 = arith.constant 1 : i32
    %181 = arith.addi %180, %c1_i32_113 : i32
    %182 = arith.index_cast %179 : i32 to index
    %c0_114 = arith.constant 0 : index
    %183 = arith.index_cast %181 : i32 to index
    %184 = vector.load %arg1[%182, %c0_114, %183] : memref<7x3x168xbf16, #tpu.memory_space<vmem>>, vector<1x3x138xbf16>
    %185 = vector.shape_cast %184 : vector<1x3x138xbf16> to vector<3x138xbf16>
    %c16 = arith.constant 16 : index
    %c0_115 = arith.constant 0 : index
    %c0_116 = arith.constant 0 : index
    %186 = vector.load %arg2[%c16, %c0_115, %c0_116] : memref<27x5x3xbf16, #tpu.memory_space<vmem>>, vector<1x5x3xbf16>
    %187 = vector.shape_cast %186 : vector<1x5x3xbf16> to vector<5x3xbf16>
    %cst_117 = arith.constant dense<0.000000e+00> : vector<5x138xf32>
    %188 = tpu.matmul %187, %185, %cst_117 {dimension_numbers = #tpu.dot_dimension_numbers<[1], [0], [0], [1], [0, 0, 1, 1], [], []>} : vector<5x3xbf16>, vector<3x138xbf16>, vector<5x138xf32> -> vector<5x138xf32>
    %189 = arith.addf %178, %188 : vector<5x138xf32>
    %c1_i32_118 = arith.constant 1 : i32
    %190 = arith.addi %arg0, %c1_i32_118 : i32
    %c28_i32_119 = arith.constant 28 : i32
    %191 = arith.addi %1, %c28_i32_119 : i32
    %c2_i32_120 = arith.constant 2 : i32
    %192 = arith.addi %191, %c2_i32_120 : i32
    %193 = arith.index_cast %190 : i32 to index
    %c0_121 = arith.constant 0 : index
    %194 = arith.index_cast %192 : i32 to index
    %195 = vector.load %arg1[%193, %c0_121, %194] : memref<7x3x168xbf16, #tpu.memory_space<vmem>>, vector<1x3x138xbf16>
    %196 = vector.shape_cast %195 : vector<1x3x138xbf16> to vector<3x138xbf16>
    %c17 = arith.constant 17 : index
    %c0_122 = arith.constant 0 : index
    %c0_123 = arith.constant 0 : index
    %197 = vector.load %arg2[%c17, %c0_122, %c0_123] : memref<27x5x3xbf16, #tpu.memory_space<vmem>>, vector<1x5x3xbf16>
    %198 = vector.shape_cast %197 : vector<1x5x3xbf16> to vector<5x3xbf16>
    %cst_124 = arith.constant dense<0.000000e+00> : vector<5x138xf32>
    %199 = tpu.matmul %198, %196, %cst_124 {dimension_numbers = #tpu.dot_dimension_numbers<[1], [0], [0], [1], [0, 0, 1, 1], [], []>} : vector<5x3xbf16>, vector<3x138xbf16>, vector<5x138xf32> -> vector<5x138xf32>
    %200 = arith.addf %189, %199 : vector<5x138xf32>
    %c2_i32_125 = arith.constant 2 : i32
    %201 = arith.addi %arg0, %c2_i32_125 : i32
    %c0_i32_126 = arith.constant 0 : i32
    %202 = arith.addi %1, %c0_i32_126 : i32
    %c0_i32_127 = arith.constant 0 : i32
    %203 = arith.addi %202, %c0_i32_127 : i32
    %204 = arith.index_cast %201 : i32 to index
    %c0_128 = arith.constant 0 : index
    %205 = arith.index_cast %203 : i32 to index
    %206 = vector.load %arg1[%204, %c0_128, %205] : memref<7x3x168xbf16, #tpu.memory_space<vmem>>, vector<1x3x138xbf16>
    %207 = vector.shape_cast %206 : vector<1x3x138xbf16> to vector<3x138xbf16>
    %c18 = arith.constant 18 : index
    %c0_129 = arith.constant 0 : index
    %c0_130 = arith.constant 0 : index
    %208 = vector.load %arg2[%c18, %c0_129, %c0_130] : memref<27x5x3xbf16, #tpu.memory_space<vmem>>, vector<1x5x3xbf16>
    %209 = vector.shape_cast %208 : vector<1x5x3xbf16> to vector<5x3xbf16>
    %cst_131 = arith.constant dense<0.000000e+00> : vector<5x138xf32>
    %210 = tpu.matmul %209, %207, %cst_131 {dimension_numbers = #tpu.dot_dimension_numbers<[1], [0], [0], [1], [0, 0, 1, 1], [], []>} : vector<5x3xbf16>, vector<3x138xbf16>, vector<5x138xf32> -> vector<5x138xf32>
    %211 = arith.addf %200, %210 : vector<5x138xf32>
    %c2_i32_132 = arith.constant 2 : i32
    %212 = arith.addi %arg0, %c2_i32_132 : i32
    %c0_i32_133 = arith.constant 0 : i32
    %213 = arith.addi %1, %c0_i32_133 : i32
    %c1_i32_134 = arith.constant 1 : i32
    %214 = arith.addi %213, %c1_i32_134 : i32
    %215 = arith.index_cast %212 : i32 to index
    %c0_135 = arith.constant 0 : index
    %216 = arith.index_cast %214 : i32 to index
    %217 = vector.load %arg1[%215, %c0_135, %216] : memref<7x3x168xbf16, #tpu.memory_space<vmem>>, vector<1x3x138xbf16>
    %218 = vector.shape_cast %217 : vector<1x3x138xbf16> to vector<3x138xbf16>
    %c19 = arith.constant 19 : index
    %c0_136 = arith.constant 0 : index
    %c0_137 = arith.constant 0 : index
    %219 = vector.load %arg2[%c19, %c0_136, %c0_137] : memref<27x5x3xbf16, #tpu.memory_space<vmem>>, vector<1x5x3xbf16>
    %220 = vector.shape_cast %219 : vector<1x5x3xbf16> to vector<5x3xbf16>
    %cst_138 = arith.constant dense<0.000000e+00> : vector<5x138xf32>
    %221 = tpu.matmul %220, %218, %cst_138 {dimension_numbers = #tpu.dot_dimension_numbers<[1], [0], [0], [1], [0, 0, 1, 1], [], []>} : vector<5x3xbf16>, vector<3x138xbf16>, vector<5x138xf32> -> vector<5x138xf32>
    %222 = arith.addf %211, %221 : vector<5x138xf32>
    %c2_i32_139 = arith.constant 2 : i32
    %223 = arith.addi %arg0, %c2_i32_139 : i32
    %c0_i32_140 = arith.constant 0 : i32
    %224 = arith.addi %1, %c0_i32_140 : i32
    %c2_i32_141 = arith.constant 2 : i32
    %225 = arith.addi %224, %c2_i32_141 : i32
    %226 = arith.index_cast %223 : i32 to index
    %c0_142 = arith.constant 0 : index
    %227 = arith.index_cast %225 : i32 to index
    %228 = vector.load %arg1[%226, %c0_142, %227] : memref<7x3x168xbf16, #tpu.memory_space<vmem>>, vector<1x3x138xbf16>
    %229 = vector.shape_cast %228 : vector<1x3x138xbf16> to vector<3x138xbf16>
    %c20 = arith.constant 20 : index
    %c0_143 = arith.constant 0 : index
    %c0_144 = arith.constant 0 : index
    %230 = vector.load %arg2[%c20, %c0_143, %c0_144] : memref<27x5x3xbf16, #tpu.memory_space<vmem>>, vector<1x5x3xbf16>
    %231 = vector.shape_cast %230 : vector<1x5x3xbf16> to vector<5x3xbf16>
    %cst_145 = arith.constant dense<0.000000e+00> : vector<5x138xf32>
    %232 = tpu.matmul %231, %229, %cst_145 {dimension_numbers = #tpu.dot_dimension_numbers<[1], [0], [0], [1], [0, 0, 1, 1], [], []>} : vector<5x3xbf16>, vector<3x138xbf16>, vector<5x138xf32> -> vector<5x138xf32>
    %233 = arith.addf %222, %232 : vector<5x138xf32>
    %c2_i32_146 = arith.constant 2 : i32
    %234 = arith.addi %arg0, %c2_i32_146 : i32
    %c14_i32_147 = arith.constant 14 : i32
    %235 = arith.addi %1, %c14_i32_147 : i32
    %c0_i32_148 = arith.constant 0 : i32
    %236 = arith.addi %235, %c0_i32_148 : i32
    %237 = arith.index_cast %234 : i32 to index
    %c0_149 = arith.constant 0 : index
    %238 = arith.index_cast %236 : i32 to index
    %239 = vector.load %arg1[%237, %c0_149, %238] : memref<7x3x168xbf16, #tpu.memory_space<vmem>>, vector<1x3x138xbf16>
    %240 = vector.shape_cast %239 : vector<1x3x138xbf16> to vector<3x138xbf16>
    %c21 = arith.constant 21 : index
    %c0_150 = arith.constant 0 : index
    %c0_151 = arith.constant 0 : index
    %241 = vector.load %arg2[%c21, %c0_150, %c0_151] : memref<27x5x3xbf16, #tpu.memory_space<vmem>>, vector<1x5x3xbf16>
    %242 = vector.shape_cast %241 : vector<1x5x3xbf16> to vector<5x3xbf16>
    %cst_152 = arith.constant dense<0.000000e+00> : vector<5x138xf32>
    %243 = tpu.matmul %242, %240, %cst_152 {dimension_numbers = #tpu.dot_dimension_numbers<[1], [0], [0], [1], [0, 0, 1, 1], [], []>} : vector<5x3xbf16>, vector<3x138xbf16>, vector<5x138xf32> -> vector<5x138xf32>
    %244 = arith.addf %233, %243 : vector<5x138xf32>
    %c2_i32_153 = arith.constant 2 : i32
    %245 = arith.addi %arg0, %c2_i32_153 : i32
    %c14_i32_154 = arith.constant 14 : i32
    %246 = arith.addi %1, %c14_i32_154 : i32
    %c1_i32_155 = arith.constant 1 : i32
    %247 = arith.addi %246, %c1_i32_155 : i32
    %248 = arith.index_cast %245 : i32 to index
    %c0_156 = arith.constant 0 : index
    %249 = arith.index_cast %247 : i32 to index
    %250 = vector.load %arg1[%248, %c0_156, %249] : memref<7x3x168xbf16, #tpu.memory_space<vmem>>, vector<1x3x138xbf16>
    %251 = vector.shape_cast %250 : vector<1x3x138xbf16> to vector<3x138xbf16>
    %c22 = arith.constant 22 : index
    %c0_157 = arith.constant 0 : index
    %c0_158 = arith.constant 0 : index
    %252 = vector.load %arg2[%c22, %c0_157, %c0_158] : memref<27x5x3xbf16, #tpu.memory_space<vmem>>, vector<1x5x3xbf16>
    %253 = vector.shape_cast %252 : vector<1x5x3xbf16> to vector<5x3xbf16>
    %cst_159 = arith.constant dense<0.000000e+00> : vector<5x138xf32>
    %254 = tpu.matmul %253, %251, %cst_159 {dimension_numbers = #tpu.dot_dimension_numbers<[1], [0], [0], [1], [0, 0, 1, 1], [], []>} : vector<5x3xbf16>, vector<3x138xbf16>, vector<5x138xf32> -> vector<5x138xf32>
    %255 = arith.addf %244, %254 : vector<5x138xf32>
    %c2_i32_160 = arith.constant 2 : i32
    %256 = arith.addi %arg0, %c2_i32_160 : i32
    %c14_i32_161 = arith.constant 14 : i32
    %257 = arith.addi %1, %c14_i32_161 : i32
    %c2_i32_162 = arith.constant 2 : i32
    %258 = arith.addi %257, %c2_i32_162 : i32
    %259 = arith.index_cast %256 : i32 to index
    %c0_163 = arith.constant 0 : index
    %260 = arith.index_cast %258 : i32 to index
    %261 = vector.load %arg1[%259, %c0_163, %260] : memref<7x3x168xbf16, #tpu.memory_space<vmem>>, vector<1x3x138xbf16>
    %262 = vector.shape_cast %261 : vector<1x3x138xbf16> to vector<3x138xbf16>
    %c23 = arith.constant 23 : index
    %c0_164 = arith.constant 0 : index
    %c0_165 = arith.constant 0 : index
    %263 = vector.load %arg2[%c23, %c0_164, %c0_165] : memref<27x5x3xbf16, #tpu.memory_space<vmem>>, vector<1x5x3xbf16>
    %264 = vector.shape_cast %263 : vector<1x5x3xbf16> to vector<5x3xbf16>
    %cst_166 = arith.constant dense<0.000000e+00> : vector<5x138xf32>
    %265 = tpu.matmul %264, %262, %cst_166 {dimension_numbers = #tpu.dot_dimension_numbers<[1], [0], [0], [1], [0, 0, 1, 1], [], []>} : vector<5x3xbf16>, vector<3x138xbf16>, vector<5x138xf32> -> vector<5x138xf32>
    %266 = arith.addf %255, %265 : vector<5x138xf32>
    %c2_i32_167 = arith.constant 2 : i32
    %267 = arith.addi %arg0, %c2_i32_167 : i32
    %c28_i32_168 = arith.constant 28 : i32
    %268 = arith.addi %1, %c28_i32_168 : i32
    %c0_i32_169 = arith.constant 0 : i32
    %269 = arith.addi %268, %c0_i32_169 : i32
    %270 = arith.index_cast %267 : i32 to index
    %c0_170 = arith.constant 0 : index
    %271 = arith.index_cast %269 : i32 to index
    %272 = vector.load %arg1[%270, %c0_170, %271] : memref<7x3x168xbf16, #tpu.memory_space<vmem>>, vector<1x3x138xbf16>
    %273 = vector.shape_cast %272 : vector<1x3x138xbf16> to vector<3x138xbf16>
    %c24 = arith.constant 24 : index
    %c0_171 = arith.constant 0 : index
    %c0_172 = arith.constant 0 : index
    %274 = vector.load %arg2[%c24, %c0_171, %c0_172] : memref<27x5x3xbf16, #tpu.memory_space<vmem>>, vector<1x5x3xbf16>
    %275 = vector.shape_cast %274 : vector<1x5x3xbf16> to vector<5x3xbf16>
    %cst_173 = arith.constant dense<0.000000e+00> : vector<5x138xf32>
    %276 = tpu.matmul %275, %273, %cst_173 {dimension_numbers = #tpu.dot_dimension_numbers<[1], [0], [0], [1], [0, 0, 1, 1], [], []>} : vector<5x3xbf16>, vector<3x138xbf16>, vector<5x138xf32> -> vector<5x138xf32>
    %277 = arith.addf %266, %276 : vector<5x138xf32>
    %c2_i32_174 = arith.constant 2 : i32
    %278 = arith.addi %arg0, %c2_i32_174 : i32
    %c28_i32_175 = arith.constant 28 : i32
    %279 = arith.addi %1, %c28_i32_175 : i32
    %c1_i32_176 = arith.constant 1 : i32
    %280 = arith.addi %279, %c1_i32_176 : i32
    %281 = arith.index_cast %278 : i32 to index
    %c0_177 = arith.constant 0 : index
    %282 = arith.index_cast %280 : i32 to index
    %283 = vector.load %arg1[%281, %c0_177, %282] : memref<7x3x168xbf16, #tpu.memory_space<vmem>>, vector<1x3x138xbf16>
    %284 = vector.shape_cast %283 : vector<1x3x138xbf16> to vector<3x138xbf16>
    %c25 = arith.constant 25 : index
    %c0_178 = arith.constant 0 : index
    %c0_179 = arith.constant 0 : index
    %285 = vector.load %arg2[%c25, %c0_178, %c0_179] : memref<27x5x3xbf16, #tpu.memory_space<vmem>>, vector<1x5x3xbf16>
    %286 = vector.shape_cast %285 : vector<1x5x3xbf16> to vector<5x3xbf16>
    %cst_180 = arith.constant dense<0.000000e+00> : vector<5x138xf32>
    %287 = tpu.matmul %286, %284, %cst_180 {dimension_numbers = #tpu.dot_dimension_numbers<[1], [0], [0], [1], [0, 0, 1, 1], [], []>} : vector<5x3xbf16>, vector<3x138xbf16>, vector<5x138xf32> -> vector<5x138xf32>
    %288 = arith.addf %277, %287 : vector<5x138xf32>
    %c2_i32_181 = arith.constant 2 : i32
    %289 = arith.addi %arg0, %c2_i32_181 : i32
    %c28_i32_182 = arith.constant 28 : i32
    %290 = arith.addi %1, %c28_i32_182 : i32
    %c2_i32_183 = arith.constant 2 : i32
    %291 = arith.addi %290, %c2_i32_183 : i32
    %292 = arith.index_cast %289 : i32 to index
    %c0_184 = arith.constant 0 : index
    %293 = arith.index_cast %291 : i32 to index
    %294 = vector.load %arg1[%292, %c0_184, %293] : memref<7x3x168xbf16, #tpu.memory_space<vmem>>, vector<1x3x138xbf16>
    %295 = vector.shape_cast %294 : vector<1x3x138xbf16> to vector<3x138xbf16>
    %c26 = arith.constant 26 : index
    %c0_185 = arith.constant 0 : index
    %c0_186 = arith.constant 0 : index
    %296 = vector.load %arg2[%c26, %c0_185, %c0_186] : memref<27x5x3xbf16, #tpu.memory_space<vmem>>, vector<1x5x3xbf16>
    %297 = vector.shape_cast %296 : vector<1x5x3xbf16> to vector<5x3xbf16>
    %cst_187 = arith.constant dense<0.000000e+00> : vector<5x138xf32>
    %298 = tpu.matmul %297, %295, %cst_187 {dimension_numbers = #tpu.dot_dimension_numbers<[1], [0], [0], [1], [0, 0, 1, 1], [], []>} : vector<5x3xbf16>, vector<3x138xbf16>, vector<5x138xf32> -> vector<5x138xf32>
    %299 = arith.addf %288, %298 : vector<5x138xf32>
    %300 = vector.broadcast %0 : vector<5x1xf32> to vector<5x138xf32>
    %301 = arith.addf %299, %300 : vector<5x138xf32>
    %cst_188 = arith.constant 0.000000e+00 : f32
    %302 = vector.broadcast %cst_188 : f32 to vector<5x138xf32>
    %303 = arith.maximumf %301, %302 : vector<5x138xf32>
    %304 = vector.shape_cast %303 : vector<5x138xf32> to vector<1x5x138xf32>
    %305 = arith.truncf %304 : vector<1x5x138xf32> to vector<1x5x138xbf16>
    %c0_189 = arith.constant 0 : index
    %c0_190 = arith.constant 0 : index
    %306 = arith.index_cast %1 : i32 to index
    %307 = vector.load %arg4[%c0_189, %c0_190, %306] : memref<1x5x140xbf16, #tpu.memory_space<vmem>>, vector<1x5x138xbf16>
    tpu.vector_store %arg4[%c0_189, %c0_190, %306], %305 {strides = array<i32>} : memref<1x5x140xbf16, #tpu.memory_space<vmem>>, vector<1x5x138xbf16>,
    %cst_191 = arith.constant 0.000000e+00 : bf16
    %308 = vector.broadcast %cst_191 : bf16 to vector<1x5x2xbf16>
    %c0_192 = arith.constant 0 : index
    %c0_193 = arith.constant 0 : index
    %c138 = arith.constant 138 : index
    %309 = vector.load %arg4[%c0_192, %c0_193, %c138] : memref<1x5x140xbf16, #tpu.memory_space<vmem>>, vector<1x5x2xbf16>
    tpu.vector_store %arg4[%c0_192, %c0_193, %c138], %308 {strides = array<i32>} : memref<1x5x140xbf16, #tpu.memory_space<vmem>>, vector<1x5x2xbf16>,
    return
  }
  func.func @transform_0(%arg0: i32) -> (i32, i32, i32) {
    %c0_i32 = arith.constant 0 : i32
    %c0_i32_0 = arith.constant 0 : i32
    %c0_i32_1 = arith.constant 0 : i32
    %c0_i32_2 = arith.constant 0 : i32
    return %c0_i32, %c0_i32_0, %c0_i32_1 : i32, i32, i32
  }
  func.func @transform_1(%arg0: i32) -> (i32, i32, i32) {
    %c0_i32 = arith.constant 0 : i32
    %c0_i32_0 = arith.constant 0 : i32
    %c0_i32_1 = arith.constant 0 : i32
    %c0_i32_2 = arith.constant 0 : i32
    return %c0_i32, %c0_i32_0, %c0_i32_1 : i32, i32, i32
  }
  func.func @transform_2(%arg0: i32) -> (i32, i32) {
    %c0_i32 = arith.constant 0 : i32
    %c0_i32_0 = arith.constant 0 : i32
    %c0_i32_1 = arith.constant 0 : i32
    return %c0_i32, %c0_i32_0 : i32, i32
  }
  func.func @transform_3(%arg0: i32) -> (i32, i32, i32) {
    %c0_i32 = arith.constant 0 : i32
    %c0_i32_0 = arith.constant 0 : i32
    %c0_i32_1 = arith.constant 0 : i32
    return %arg0, %c0_i32, %c0_i32_0 : i32, i32, i32
  }
}

</mosaic_0001>

<llo_original>
// kernel: _lambda_.3
$region0: #{_lambda_.3}
  #allocation0 [shape = 'u32[]', space=smem, size = 0x4, offset = 0x4, fixed_abs, tag = 'smem constant byte address 0x4 - core index']
  #allocation1 [shape = 'u32[72,128]{1,0:T(1,128)}', space=vmem, size = 0x9000, scoped, tag = 'internal scratch']
  %s0 = inlined_call_operand.vmem [shape: bf16[5,5,140], index: 0, kind: input, shape index: {}]
  %s1 = inlined_call_operand.vmem [shape: bf16[9,4,5], index: 1, kind: input, shape index: {}]
  %s2 = inlined_call_operand.vmem [shape: f32[4,1], index: 2, kind: input, shape index: {}]
  %s3 = inlined_call_operand.vmem [shape: bf16[5,4,112], index: 3, kind: output, shape index: {}]
  %s4 = sld [smem:[#allocation0]]
  $region45: #{_lambda_.3} parent=0
    _
  %s6 = ssub.s32 1, %s4
  %s7 = scalar_select 0, %s6, %s4
  loop: start=0, step=1, limit=7
  $region2: #{_lambda_.3} parent=0 // loop_pre_header
    _
  $region3: #{_lambda_.3} parent=0 // loop_header
    %s9 = sphi 0, %s13
    %p10 = scmp.ge.s32.totalorder %s9, 7
    %s17 = sphi 0, %s17
    %s19 = sphi 0, %s17
    %s20 = sphi 0, %s19
    %s34 = sphi 0, %s20
    %s38 = sphi 0, %s38
    %s40 = sphi 0, %s38
    %s41 = sphi 0, %s40
    %s55 = sphi 0, %s41
    %s59 = sphi 0, %s59
    %s61 = sphi 0, %s59
    %s62 = sphi 0, %s61
    %s76 = sphi 0, %s62
    %s82 = sphi 0, %s84
    %s85 = sphi 0, %s82
    %s86 = sphi 0, %s85
    %s102 = sphi 0, %s86
  $region4: #{_lambda_.3} parent=0 // loop_header_branch
    %12 = sbr.rel (%p10) target = $region8
  $region5: #{_lambda_.3} parent=0 // loop_body
    %s14 = ssub.s32 %s9, 1
    %s15 = ssub.s32 %s9, 2
    %s16 = sadd.s32 %s9, 1
    %s18 = sadd.s32 %s17, 1
    %p21 = scmp.eq.s32.totalorder %s9, 4
    %p22 = scmp.ne.s32.totalorder %s17, %s19
    %p23 = scmp.eq.s32.totalorder %s9, 0
    %p24 = por %p22, %p23
    %p25 = scmp.ne.s32.totalorder %s17, %s19
    %p26 = scmp.eq.s32.totalorder %s14, 4
    %p27 = por %p25, %p26
    %p28 = scmp.ne.s32.totalorder %s19, %s20
    %p29 = scmp.eq.s32.totalorder %s14, 0
    %p30 = por %p28, %p29
    %p31 = scmp.ne.s32.totalorder %s19, %s20
    %p32 = scmp.eq.s32.totalorder %s15, 4
    %p33 = por %p31, %p32
    %p35 = scmp.ne.s32.totalorder %s20, %s34
    %p36 = scmp.eq.s32.totalorder %s15, 0
    %p37 = por %p35, %p36
    %s39 = sadd.s32 %s38, 1
    %p42 = scmp.eq.s32.totalorder %s9, 4
    %p43 = scmp.ne.s32.totalorder %s38, %s40
    %p44 = scmp.eq.s32.totalorder %s9, 0
    %p45 = por %p43, %p44
    %p46 = scmp.ne.s32.totalorder %s38, %s40
    %p47 = scmp.eq.s32.totalorder %s14, 4
    %p48 = por %p46, %p47
    %p49 = scmp.ne.s32.totalorder %s40, %s41
    %p50 = scmp.eq.s32.totalorder %s14, 0
    %p51 = por %p49, %p50
    %p52 = scmp.ne.s32.totalorder %s40, %s41
    %p53 = scmp.eq.s32.totalorder %s15, 4
    %p54 = por %p52, %p53
    %p56 = scmp.ne.s32.totalorder %s41, %s55
    %p57 = scmp.eq.s32.totalorder %s15, 0
    %p58 = por %p56, %p57
    %s60 = sadd.s32 %s59, 1
    %p63 = scmp.eq.s32.totalorder %s9, 4
    %p64 = scmp.ne.s32.totalorder %s59, %s61
    %p65 = scmp.eq.s32.totalorder %s9, 0
    %p66 = por %p64, %p65
    %p67 = scmp.ne.s32.totalorder %s59, %s61
    %p68 = scmp.eq.s32.totalorder %s14, 4
    %p69 = por %p67, %p68
    %p70 = scmp.ne.s32.totalorder %s61, %s62
    %p71 = scmp.eq.s32.totalorder %s14, 0
    %p72 = por %p70, %p71
    %p73 = scmp.ne.s32.totalorder %s61, %s62
    %p74 = scmp.eq.s32.totalorder %s15, 4
    %p75 = por %p73, %p74
    %p77 = scmp.ne.s32.totalorder %s62, %s76
    %p78 = scmp.eq.s32.totalorder %s15, 0
    %p79 = por %p77, %p78
    %s80 = ssub.s32 %s9, %s16
    %p81 = scmp.eq.s32.totalorder %s80, 0
    %s83 = sadd.s32 %s82, 1
    %s84 = scalar_select %p81, %s82, %s83
    %p87 = pneg %p81
    %p88 = scmp.eq.s32.totalorder %s9, 4
    %p89 = por %p87, %p88
    %p90 = scmp.ne.s32.totalorder %s82, %s85
    %p91 = scmp.eq.s32.totalorder %s9, 0
    %p92 = por %p90, %p91
    %p93 = scmp.ne.s32.totalorder %s82, %s85
    %p94 = scmp.eq.s32.totalorder %s14, 4
    %p95 = por %p93, %p94
    %p96 = scmp.ne.s32.totalorder %s85, %s86
    %p97 = scmp.eq.s32.totalorder %s14, 0
    %p98 = por %p96, %p97
    %p99 = scmp.ne.s32.totalorder %s85, %s86
    %p100 = scmp.eq.s32.totalorder %s15, 4
    %p101 = por %p99, %p100
    %p103 = scmp.ne.s32.totalorder %s86, %s102
    %p104 = scmp.eq.s32.totalorder %s15, 0
    %p105 = por %p103, %p104
    %p106 = scmp.le.s32.totalorder 1, %s9
    %p107 = scmp.lt.s32.totalorder %s9, 6
    %p108 = pnand %p106, %p107
    %p109 = pneg %p108
    // Predicated region
    $region9: #{_lambda_.3} parent=5 // pred_check
      _
    $region10: #{_lambda_.3} parent=5 // pred_check_branch
      %111 = sbr.rel (%p108) target = $region12
    $region11: #{_lambda_.3} parent=5 // pred_region
      %s112 = ssub.s32 %s9, 1
      // Predicated region
      $region13: #{_lambda_.3} parent=11 // pred_check
        %p113 = pneg %p30
      $region14: #{_lambda_.3} parent=11 // pred_check_branch
        %115 = sbr.rel (%p113) target = $region16
      $region15: #{_lambda_.3} parent=11 // pred_region
        _
      $region16: #{_lambda_.3} parent=11 // pred_fallthru
        _
      // Predicated region
      $region17: #{_lambda_.3} parent=11 // pred_check
        %p116 = pneg %p51
      $region18: #{_lambda_.3} parent=11 // pred_check_branch
        %118 = sbr.rel (%p116) target = $region20
      $region19: #{_lambda_.3} parent=11 // pred_region
        _
      $region20: #{_lambda_.3} parent=11 // pred_fallthru
        _
      // Predicated region
      $region21: #{_lambda_.3} parent=11 // pred_check
        %p119 = pneg %p72
      $region22: #{_lambda_.3} parent=11 // pred_check_branch
        %121 = sbr.rel (%p119) target = $region24
      $region23: #{_lambda_.3} parent=11 // pred_region
        _
      $region24: #{_lambda_.3} parent=11 // pred_fallthru
        _
    $region12: #{_lambda_.3} parent=5 // pred_fallthru
      _
    %p122 = scmp.lt.s32.totalorder %s9, 5
    // Predicated region
    $region25: #{_lambda_.3} parent=5 // pred_check
      %p123 = pneg %p122
    $region26: #{_lambda_.3} parent=5 // pred_check_branch
      %125 = sbr.rel (%p123) target = $region28
    $region27: #{_lambda_.3} parent=5 // pred_region
      _
    $region28: #{_lambda_.3} parent=5 // pred_fallthru
      _
    %p126 = scmp.le.s32.totalorder 1, %s9
    %p127 = scmp.lt.s32.totalorder %s9, 6
    %p128 = pnand %p126, %p127
    %p129 = pneg %p128
    // Predicated region
    $region29: #{_lambda_.3} parent=5 // pred_check
      _
    $region30: #{_lambda_.3} parent=5 // pred_check_branch
      %131 = sbr.rel (%p128) target = $region32
    $region31: #{_lambda_.3} parent=5 // pred_region
      %s132 = ssub.s32 %s9, 1
      %p133 = pneg %p30
      %p134 = pneg %p27
      %p135 = pneg %p51
      %p136 = pneg %p48
      %p137 = pneg %p72
      %p138 = pneg %p69
      %p139 = pneg %p98
      %p140 = pneg %p95
      %p141 = scmp.lt.s32.totalorder %s14, 4
      %s142 = scalar_select %p141, %s14, 4
      %s143 = smul.addr %s142, 2
      %s144 = scalar_lea.vmem %s3, %s143
      %p145 = scmp.lt.s32.totalorder %s14, 4
      %s146 = scalar_select %p145, %s14, 4
      %s147 = smul.addr %s146, 2
      %s148 = scalar_lea.vmem %s3, %s147
      %v150 = vld [vmem:[%s2] sm:$0xf]
      %s151 = smul.u32 %s14, 2
      %s152 = smul.addr %s151, 4
      %s153 = scalar_lea.vmem %s0, %s152
      %v154 = vld [vmem:[%s153] sm:$0x7]
      %v155 = vld [vmem:[%s1] sm:$0x3]
      %s156 = scalar_lea.vmem %s1, 2
      %v157 = vld [vmem:[%s156] sm:$0x3]
      %v159 = vunpack.c.l.b16 %v154
      %v160 = vpack.c.b16 %v159, %v159
      %161 = vrot.lane.b32.xlu0 %v160, 127
      %v162 = vpop.permute.xlu0 %161
      %vm163 = vcmask 39936
      %v165 = vsel %vm163, %v157, 0
      %vm167 = vcmask 1041408
      %vm168 = vcmask 1042432
      %v169 = vsel %vm167, 4294967295, 65535
      %v170 = vsel %vm168, %v169, 0
      %v172 = vand.u32 %v162, %v170
      %174 = vmatpush.bf16.msra.mxu0 0
      %175 = vmatpush.bf16.msra.mxu0 0
      %176 = vmatpush.bf16.msra.mxu0 0
      %177 = vmatpush.bf16.msra.mxu0 0
      %178 = vmatpush.bf16.msra.mxu0 0
      %179 = vmatpush.bf16.msra.mxu0 0
      %180 = vmatpush.bf16.msra.mxu0 0
      %181 = vmatpush.bf16.msra.mxu0 %v172
      %182 = vmatmul.bf16.gmra.mxu0 %v165
      %v183 = vpop.f32.mrf.mxu0
      %v184 = vadd.f32 0.0, %v183
      %v185 = vpop.f32.mrf.mxu0
      %186 = vdwg.mxu0
      %v188 = vsel %vm163, %v155, 0
      %v191 = vand.u32 %v154, %v170
      %193 = vmatpush.bf16.msra.mxu0 0
      %194 = vmatpush.bf16.msra.mxu0 0
      %195 = vmatpush.bf16.msra.mxu0 0
      %196 = vmatpush.bf16.msra.mxu0 0
      %197 = vmatpush.bf16.msra.mxu0 0
      %198 = vmatpush.bf16.msra.mxu0 0
      %199 = vmatpush.bf16.msra.mxu0 0
      %200 = vmatpush.bf16.msra.mxu0 %v191
      %201 = vmatmul.bf16.gmra.mxu0 %v188
      %v202 = vpop.f32.mrf.mxu0
      %v203 = vadd.f32 %v184, %v202
      %v204 = vpop.f32.mrf.mxu0
      %205 = vdwg.mxu0
      %s206 = scalar_lea.vmem %s1, 4
      %v207 = vld [vmem:[%s206] sm:$0x3]
      %208 = vrot.lane.b32.xlu0 %v160, 126
      %v209 = vpop.permute.xlu0 %208
      %v211 = vsel %vm163, %v207, 0
      %v214 = vand.u32 %v209, %v170
      %216 = vmatpush.bf16.msra.mxu0 0
      %217 = vmatpush.bf16.msra.mxu0 0
      %218 = vmatpush.bf16.msra.mxu0 0
      %219 = vmatpush.bf16.msra.mxu0 0
      %220 = vmatpush.bf16.msra.mxu0 0
      %221 = vmatpush.bf16.msra.mxu0 0
      %222 = vmatpush.bf16.msra.mxu0 0
      %223 = vmatpush.bf16.msra.mxu0 %v214
      %224 = vmatmul.bf16.gmra.mxu0 %v211
      %v225 = vpop.f32.mrf.mxu0
      %v226 = vadd.f32 0.0, %v225
      %v227 = vpop.f32.mrf.mxu0
      %228 = vdwg.mxu0
      %v229 = vadd.f32 %v203, %v226
      %s230 = scalar_lea.vmem %s1, 6
      %v231 = vld [vmem:[%s230] sm:$0x3]
      %232 = vrot.lane.b32.xlu0 %v160, 114
      %v233 = vpop.permute.xlu0 %232
      %v235 = vsel %vm163, %v231, 0
      %v238 = vand.u32 %v233, %v170
      %240 = vmatpush.bf16.msra.mxu0 0
      %241 = vmatpush.bf16.msra.mxu0 0
      %242 = vmatpush.bf16.msra.mxu0 0
      %243 = vmatpush.bf16.msra.mxu0 0
      %244 = vmatpush.bf16.msra.mxu0 0
      %245 = vmatpush.bf16.msra.mxu0 0
      %246 = vmatpush.bf16.msra.mxu0 0
      %247 = vmatpush.bf16.msra.mxu0 %v238
      %248 = vmatmul.bf16.gmra.mxu0 %v235
      %v249 = vpop.f32.mrf.mxu0
      %v250 = vadd.f32 0.0, %v249
      %v251 = vpop.f32.mrf.mxu0
      %252 = vdwg.mxu0
      %v253 = vadd.f32 %v229, %v250
      %s254 = scalar_lea.vmem %s1, 8
      %v255 = vld [vmem:[%s254] sm:$0x3]
      %256 = vrot.lane.b32.xlu0 %v160, 113
      %v257 = vpop.permute.xlu0 %256
      %v259 = vsel %vm163, %v255, 0
      %v262 = vand.u32 %v257, %v170
      %264 = vmatpush.bf16.msra.mxu0 0
      %265 = vmatpush.bf16.msra.mxu0 0
      %266 = vmatpush.bf16.msra.mxu0 0
      %267 = vmatpush.bf16.msra.mxu0 0
      %268 = vmatpush.bf16.msra.mxu0 0
      %269 = vmatpush.bf16.msra.mxu0 0
      %270 = vmatpush.bf16.msra.mxu0 0
      %271 = vmatpush.bf16.msra.mxu0 %v262
      %272 = vmatmul.bf16.gmra.mxu0 %v259
      %v273 = vpop.f32.mrf.mxu0
      %v274 = vadd.f32 0.0, %v273
      %v275 = vpop.f32.mrf.mxu0
      %276 = vdwg.mxu0
      %v277 = vadd.f32 %v253, %v274
      %s278 = scalar_lea.vmem %s1, 10
      %v279 = vld [vmem:[%s278] sm:$0x3]
      %280 = vrot.lane.b32.xlu0 %v160, 112
      %v281 = vpop.permute.xlu0 %280
      %v283 = vsel %vm163, %v279, 0
      %v286 = vand.u32 %v281, %v170
      %288 = vmatpush.bf16.msra.mxu0 0
      %289 = vmatpush.bf16.msra.mxu0 0
      %290 = vmatpush.bf16.msra.mxu0 0
      %291 = vmatpush.bf16.msra.mxu0 0
      %292 = vmatpush.bf16.msra.mxu0 0
      %293 = vmatpush.bf16.msra.mxu0 0
      %294 = vmatpush.bf16.msra.mxu0 0
      %295 = vmatpush.bf16.msra.mxu0 %v286
      %296 = vmatmul.bf16.gmra.mxu0 %v283
      %v297 = vpop.f32.mrf.mxu0
      %v298 = vadd.f32 0.0, %v297
      %v299 = vpop.f32.mrf.mxu0
      %300 = vdwg.mxu0
      %v301 = vadd.f32 %v277, %v298
      %v302 = vld [vmem:[%s153] sm:$0x77]
      %s303 = scalar_lea.vmem %s1, 12
      %v304 = vld [vmem:[%s303] sm:$0x3]
      %v306 = vunpack.c.l.b16 %v302
      %v307 = vunpack.c.h.b16 %v302
      %v308 = vpack.c.b16 %v306, %v306
      %v309 = vpack.c.b16 %v307, %v307
      %310 = vrot.lane.b32.xlu0 %v308, 100
      %v311 = vpop.permute.xlu0 %310
      %312 = vrot.lane.b32.xlu0 %v309, 100
      %v313 = vpop.permute.xlu0 %312
      %vm314 = vcmask 818176
      %v315 = vsel %vm314, %v311, %v313
      %v317 = vsel %vm163, %v304, 0
      %v320 = vand.u32 %v315, %v170
      %322 = vmatpush.bf16.msra.mxu0 0
      %323 = vmatpush.bf16.msra.mxu0 0
      %324 = vmatpush.bf16.msra.mxu0 0
      %325 = vmatpush.bf16.msra.mxu0 0
      %326 = vmatpush.bf16.msra.mxu0 0
      %327 = vmatpush.bf16.msra.mxu0 0
      %328 = vmatpush.bf16.msra.mxu0 0
      %329 = vmatpush.bf16.msra.mxu0 %v320
      %330 = vmatmul.bf16.gmra.mxu0 %v317
      %v331 = vpop.f32.mrf.mxu0
      %v332 = vadd.f32 0.0, %v331
      %v333 = vpop.f32.mrf.mxu0
      %334 = vdwg.mxu0
      %v335 = vadd.f32 %v301, %v332
      %s336 = scalar_lea.vmem %s1, 14
      %v337 = vld [vmem:[%s336] sm:$0x3]
      %338 = vrot.lane.b32.xlu0 %v308, 99
      %v339 = vpop.permute.xlu0 %338
      %340 = vrot.lane.b32.xlu0 %v309, 99
      %v341 = vpop.permute.xlu0 %340
      %vm342 = vcmask 809984
      %v343 = vsel %vm342, %v339, %v341
      %v345 = vsel %vm163, %v337, 0
      %v348 = vand.u32 %v343, %v170
      %350 = vmatpush.bf16.msra.mxu0 0
      %351 = vmatpush.bf16.msra.mxu0 0
      %352 = vmatpush.bf16.msra.mxu0 0
      %353 = vmatpush.bf16.msra.mxu0 0
      %354 = vmatpush.bf16.msra.mxu0 0
      %355 = vmatpush.bf16.msra.mxu0 0
      %356 = vmatpush.bf16.msra.mxu0 0
      %357 = vmatpush.bf16.msra.mxu0 %v348
      %358 = vmatmul.bf16.gmra.mxu0 %v345
      %v359 = vpop.f32.mrf.mxu0
      %v360 = vadd.f32 0.0, %v359
      %v361 = vpop.f32.mrf.mxu0
      %362 = vdwg.mxu0
      %v363 = vadd.f32 %v335, %v360
      %s364 = scalar_lea.vmem %s1, 16
      %v365 = vld [vmem:[%s364] sm:$0x3]
      %366 = vrot.lane.b32.xlu0 %v308, 98
      %v367 = vpop.permute.xlu0 %366
      %368 = vrot.lane.b32.xlu0 %v309, 98
      %v369 = vpop.permute.xlu0 %368
      %vm370 = vcmask 801792
      %v371 = vsel %vm370, %v367, %v369
      %v373 = vsel %vm163, %v365, 0
      %v376 = vand.u32 %v371, %v170
      %378 = vmatpush.bf16.msra.mxu0 0
      %379 = vmatpush.bf16.msra.mxu0 0
      %380 = vmatpush.bf16.msra.mxu0 0
      %381 = vmatpush.bf16.msra.mxu0 0
      %382 = vmatpush.bf16.msra.mxu0 0
      %383 = vmatpush.bf16.msra.mxu0 0
      %384 = vmatpush.bf16.msra.mxu0 0
      %385 = vmatpush.bf16.msra.mxu0 %v376
      %386 = vmatmul.bf16.gmra.mxu0 %v373
      %v387 = vpop.f32.mrf.mxu0
      %v388 = vadd.f32 0.0, %v387
      %v389 = vpop.f32.mrf.mxu0
      %390 = vdwg.mxu0
      %v391 = vadd.f32 %v363, %v388
      %393 = vset.pattern.permute.xlu0 0
      %394 = vperm.xlu0 %393, %v150
      %v395 = vpop.permute.xlu0 %394
      %v397 = vadd.f32 %v391, %v395
      %v398 = vmax.f32 %v397, 0.0
      %v399 = vpack.c.bf16 %v398, %v398
      %vm400 = vcmask 893952
      %401 = vst.msk [vmem:[%s148] sm:$0x3] %vm400, %v399
      %vm402 = vcmask 911216
      %403 = vst.msk [vmem:[%s148] sm:$0x3] %vm402, 0
      %p404 = scmp.lt.s32.totalorder %s14, 4
      %s405 = scalar_select %p404, %s14, 4
      %s406 = smul.addr %s405, 2
      %s407 = scalar_lea.vmem %s3, %s406
      // Predicated region
      $region33: #{_lambda_.3} parent=31 // pred_check
        %p408 = pneg %p95
      $region34: #{_lambda_.3} parent=31 // pred_check_branch
        %410 = sbr.rel (%p408) target = $region36
      $region35: #{_lambda_.3} parent=31 // pred_region
        _
      $region36: #{_lambda_.3} parent=31 // pred_fallthru
        _
    $region32: #{_lambda_.3} parent=5 // pred_fallthru
      _
    %p411 = scmp.le.s32.totalorder 2, %s9
    // Predicated region
    $region37: #{_lambda_.3} parent=5 // pred_check
      %p412 = pneg %p411
    $region38: #{_lambda_.3} parent=5 // pred_check_branch
      %414 = sbr.rel (%p412) target = $region40
    $region39: #{_lambda_.3} parent=5 // pred_region
      %s415 = ssub.s32 %s9, 2
      // Predicated region
      $region41: #{_lambda_.3} parent=39 // pred_check
        %p416 = pneg %p101
      $region42: #{_lambda_.3} parent=39 // pred_check_branch
        %418 = sbr.rel (%p416) target = $region44
      $region43: #{_lambda_.3} parent=39 // pred_region
        %p419 = scmp.lt.s32.totalorder %s15, 4
        %s420 = scalar_select %p419, %s15, 4
        %s421 = smul.addr %s420, 2
        %s422 = scalar_lea.vmem %s3, %s421
      $region44: #{_lambda_.3} parent=39 // pred_fallthru
        _
    $region40: #{_lambda_.3} parent=5 // pred_fallthru
      _
  $region6: #{_lambda_.3} parent=0 // loop_footer
    %s13 = sadd.s32 1, %s9
  $region7: #{_lambda_.3} parent=0 // loop_footer_branch
    %8 = sbr.rel target = $region3
  $region8: #{_lambda_.3} parent=0 // loop_exit
    _

// kernel: _lambda_.2
$region0: #{_lambda_.2}
  #allocation0 [shape = 'u32[]', space=smem, size = 0x4, offset = 0x4, fixed_abs, tag = 'smem constant byte address 0x4 - core index']
  #allocation1 [shape = 'u32[72,128]{1,0:T(1,128)}', space=vmem, size = 0x9000, scoped, tag = 'internal scratch']
  %s0 = inlined_call_operand.vmem [shape: bf16[7,3,168], index: 0, kind: input, shape index: {}]
  %s1 = inlined_call_operand.vmem [shape: bf16[27,5,3], index: 1, kind: input, shape index: {}]
  %s2 = inlined_call_operand.vmem [shape: f32[5,1], index: 2, kind: input, shape index: {}]
  %s3 = inlined_call_operand.vmem [shape: bf16[5,5,140], index: 3, kind: output, shape index: {}]
  %s4 = sld [smem:[#allocation0]]
  $region45: #{_lambda_.2} parent=0
    _
  %s6 = ssub.s32 1, %s4
  %s7 = scalar_select 0, %s6, %s4
  loop: start=0, step=1, limit=7
  $region2: #{_lambda_.2} parent=0 // loop_pre_header
    _
  $region3: #{_lambda_.2} parent=0 // loop_header
    %s9 = sphi 0, %s13
    %p10 = scmp.ge.s32.totalorder %s9, 7
    %s17 = sphi 0, %s17
    %s19 = sphi 0, %s17
    %s20 = sphi 0, %s19
    %s34 = sphi 0, %s20
    %s38 = sphi 0, %s38
    %s40 = sphi 0, %s38
    %s41 = sphi 0, %s40
    %s55 = sphi 0, %s41
    %s59 = sphi 0, %s59
    %s61 = sphi 0, %s59
    %s62 = sphi 0, %s61
    %s76 = sphi 0, %s62
    %s82 = sphi 0, %s84
    %s85 = sphi 0, %s82
    %s86 = sphi 0, %s85
    %s102 = sphi 0, %s86
  $region4: #{_lambda_.2} parent=0 // loop_header_branch
    %12 = sbr.rel (%p10) target = $region8
  $region5: #{_lambda_.2} parent=0 // loop_body
    %s14 = ssub.s32 %s9, 1
    %s15 = ssub.s32 %s9, 2
    %s16 = sadd.s32 %s9, 1
    %s18 = sadd.s32 %s17, 1
    %p21 = scmp.eq.s32.totalorder %s9, 4
    %p22 = scmp.ne.s32.totalorder %s17, %s19
    %p23 = scmp.eq.s32.totalorder %s9, 0
    %p24 = por %p22, %p23
    %p25 = scmp.ne.s32.totalorder %s17, %s19
    %p26 = scmp.eq.s32.totalorder %s14, 4
    %p27 = por %p25, %p26
    %p28 = scmp.ne.s32.totalorder %s19, %s20
    %p29 = scmp.eq.s32.totalorder %s14, 0
    %p30 = por %p28, %p29
    %p31 = scmp.ne.s32.totalorder %s19, %s20
    %p32 = scmp.eq.s32.totalorder %s15, 4
    %p33 = por %p31, %p32
    %p35 = scmp.ne.s32.totalorder %s20, %s34
    %p36 = scmp.eq.s32.totalorder %s15, 0
    %p37 = por %p35, %p36
    %s39 = sadd.s32 %s38, 1
    %p42 = scmp.eq.s32.totalorder %s9, 4
    %p43 = scmp.ne.s32.totalorder %s38, %s40
    %p44 = scmp.eq.s32.totalorder %s9, 0
    %p45 = por %p43, %p44
    %p46 = scmp.ne.s32.totalorder %s38, %s40
    %p47 = scmp.eq.s32.totalorder %s14, 4
    %p48 = por %p46, %p47
    %p49 = scmp.ne.s32.totalorder %s40, %s41
    %p50 = scmp.eq.s32.totalorder %s14, 0
    %p51 = por %p49, %p50
    %p52 = scmp.ne.s32.totalorder %s40, %s41
    %p53 = scmp.eq.s32.totalorder %s15, 4
    %p54 = por %p52, %p53
    %p56 = scmp.ne.s32.totalorder %s41, %s55
    %p57 = scmp.eq.s32.totalorder %s15, 0
    %p58 = por %p56, %p57
    %s60 = sadd.s32 %s59, 1
    %p63 = scmp.eq.s32.totalorder %s9, 4
    %p64 = scmp.ne.s32.totalorder %s59, %s61
    %p65 = scmp.eq.s32.totalorder %s9, 0
    %p66 = por %p64, %p65
    %p67 = scmp.ne.s32.totalorder %s59, %s61
    %p68 = scmp.eq.s32.totalorder %s14, 4
    %p69 = por %p67, %p68
    %p70 = scmp.ne.s32.totalorder %s61, %s62
    %p71 = scmp.eq.s32.totalorder %s14, 0
    %p72 = por %p70, %p71
    %p73 = scmp.ne.s32.totalorder %s61, %s62
    %p74 = scmp.eq.s32.totalorder %s15, 4
    %p75 = por %p73, %p74
    %p77 = scmp.ne.s32.totalorder %s62, %s76
    %p78 = scmp.eq.s32.totalorder %s15, 0
    %p79 = por %p77, %p78
    %s80 = ssub.s32 %s9, %s16
    %p81 = scmp.eq.s32.totalorder %s80, 0
    %s83 = sadd.s32 %s82, 1
    %s84 = scalar_select %p81, %s82, %s83
    %p87 = pneg %p81
    %p88 = scmp.eq.s32.totalorder %s9, 4
    %p89 = por %p87, %p88
    %p90 = scmp.ne.s32.totalorder %s82, %s85
    %p91 = scmp.eq.s32.totalorder %s9, 0
    %p92 = por %p90, %p91
    %p93 = scmp.ne.s32.totalorder %s82, %s85
    %p94 = scmp.eq.s32.totalorder %s14, 4
    %p95 = por %p93, %p94
    %p96 = scmp.ne.s32.totalorder %s85, %s86
    %p97 = scmp.eq.s32.totalorder %s14, 0
    %p98 = por %p96, %p97
    %p99 = scmp.ne.s32.totalorder %s85, %s86
    %p100 = scmp.eq.s32.totalorder %s15, 4
    %p101 = por %p99, %p100
    %p103 = scmp.ne.s32.totalorder %s86, %s102
    %p104 = scmp.eq.s32.totalorder %s15, 0
    %p105 = por %p103, %p104
    %p106 = scmp.le.s32.totalorder 1, %s9
    %p107 = scmp.lt.s32.totalorder %s9, 6
    %p108 = pnand %p106, %p107
    %p109 = pneg %p108
    // Predicated region
    $region9: #{_lambda_.2} parent=5 // pred_check
      _
    $region10: #{_lambda_.2} parent=5 // pred_check_branch
      %111 = sbr.rel (%p108) target = $region12
    $region11: #{_lambda_.2} parent=5 // pred_region
      %s112 = ssub.s32 %s9, 1
      // Predicated region
      $region13: #{_lambda_.2} parent=11 // pred_check
        %p113 = pneg %p30
      $region14: #{_lambda_.2} parent=11 // pred_check_branch
        %115 = sbr.rel (%p113) target = $region16
      $region15: #{_lambda_.2} parent=11 // pred_region
        _
      $region16: #{_lambda_.2} parent=11 // pred_fallthru
        _
      // Predicated region
      $region17: #{_lambda_.2} parent=11 // pred_check
        %p116 = pneg %p51
      $region18: #{_lambda_.2} parent=11 // pred_check_branch
        %118 = sbr.rel (%p116) target = $region20
      $region19: #{_lambda_.2} parent=11 // pred_region
        _
      $region20: #{_lambda_.2} parent=11 // pred_fallthru
        _
      // Predicated region
      $region21: #{_lambda_.2} parent=11 // pred_check
        %p119 = pneg %p72
      $region22: #{_lambda_.2} parent=11 // pred_check_branch
        %121 = sbr.rel (%p119) target = $region24
      $region23: #{_lambda_.2} parent=11 // pred_region
        _
      $region24: #{_lambda_.2} parent=11 // pred_fallthru
        _
    $region12: #{_lambda_.2} parent=5 // pred_fallthru
      _
    %p122 = scmp.lt.s32.totalorder %s9, 5
    // Predicated region
    $region25: #{_lambda_.2} parent=5 // pred_check
      %p123 = pneg %p122
    $region26: #{_lambda_.2} parent=5 // pred_check_branch
      %125 = sbr.rel (%p123) target = $region28
    $region27: #{_lambda_.2} parent=5 // pred_region
      _
    $region28: #{_lambda_.2} parent=5 // pred_fallthru
      _
    %p126 = scmp.le.s32.totalorder 1, %s9
    %p127 = scmp.lt.s32.totalorder %s9, 6
    %p128 = pnand %p126, %p127
    %p129 = pneg %p128
    // Predicated region
    $region29: #{_lambda_.2} parent=5 // pred_check
      _
    $region30: #{_lambda_.2} parent=5 // pred_check_branch
      %131 = sbr.rel (%p128) target = $region32
    $region31: #{_lambda_.2} parent=5 // pred_region
      %s132 = ssub.s32 %s9, 1
      %p133 = pneg %p30
      %p134 = pneg %p27
      %p135 = pneg %p51
      %p136 = pneg %p48
      %p137 = pneg %p72
      %p138 = pneg %p69
      %p139 = pneg %p98
      %p140 = pneg %p95
      %p141 = scmp.lt.s32.totalorder %s14, 4
      %s142 = scalar_select %p141, %s14, 4
      %s143 = smul.addr %s142, 2
      %s144 = smul.addr %s143, 4
      %s145 = scalar_lea.vmem %s3, %s144
      %p146 = scmp.lt.s32.totalorder %s14, 4
      %s147 = scalar_select %p146, %s14, 4
      %s148 = smul.addr %s147, 2
      %s149 = smul.addr %s148, 4
      %s150 = scalar_lea.vmem %s3, %s149
      %v152 = vld [vmem:[%s2] sm:$0x1f]
      %s153 = smul.u32 %s14, 2
      %s154 = smul.addr %s153, 2
      %s155 = scalar_lea.vmem %s0, %s154
      %v156 = vld [vmem:[%s155] sm:$0xf]
      %v157 = vld [vmem:[%s1] sm:$0x7]
      %s158 = scalar_lea.vmem %s1, 4
      %v159 = vld [vmem:[%s158] sm:$0x7]
      %161 = vst [vmem:[#allocation1] ss:$4 sm:$0xff] %v156
      %v162 = vld.sshfl [vmem:[#allocation1] sm:$0xff pattern:$0x73625140]
      %v164 = vld.sshfl [vmem:[#allocation1 + $0x8] sm:$0xff pattern:$0x73625140]
      %166 = vrot.lane.b32.xlu0 %v162, 127
      %v167 = vpop.permute.xlu0 %166
      %168 = vrot.lane.b32.xlu0 %v164, 127
      %v169 = vpop.permute.xlu0 %168
      %vm170 = vcmask 1039360
      %v171 = vsel %vm170, %v167, %v169
      %vm172 = vcmask 23552
      %v174 = vsel %vm172, %v159, 0
      %vm176 = vcmask 1040384
      %vm177 = vcmask 1041408
      %v178 = vsel %vm176, 4294967295, 65535
      %v179 = vsel %vm177, %v178, 0
      %v181 = vand.u32 %v171, %v179
      %v184 = vand.u32 %v169, %v179
      %186 = vmatpush.bf16.msra.mxu0 0
      %187 = vmatpush.bf16.msra.mxu0 0
      %188 = vmatpush.bf16.msra.mxu0 0
      %189 = vmatpush.bf16.msra.mxu0 0
      %190 = vmatpush.bf16.msra.mxu0 0
      %191 = vmatpush.bf16.msra.mxu0 0
      %192 = vmatpush.bf16.msra.mxu0 0
      %193 = vmatpush.bf16.msra.mxu0 %v181
      %194 = vmatmul.bf16.gmra.mxu0 %v174
      %v195 = vpop.f32.mrf.mxu0
      %v196 = vadd.f32 0.0, %v195
      %v197 = vpop.f32.mrf.mxu0
      %198 = vdwg.mxu0
      %199 = vmatpush.bf16.msra.mxu0 0
      %200 = vmatpush.bf16.msra.mxu0 0
      %201 = vmatpush.bf16.msra.mxu0 0
      %202 = vmatpush.bf16.msra.mxu0 0
      %203 = vmatpush.bf16.msra.mxu0 0
      %204 = vmatpush.bf16.msra.mxu0 0
      %205 = vmatpush.bf16.msra.mxu0 0
      %206 = vmatpush.bf16.msra.mxu0 %v184
      %207 = vmatmul.bf16.gmra.mxu0 %v174
      %v208 = vpop.f32.mrf.mxu0
      %v209 = vadd.f32 0.0, %v208
      %v210 = vpop.f32.mrf.mxu0
      %211 = vdwg.mxu0
      %212 = vst [vmem:[#allocation1] ss:$4 sm:$0xff] %v156
      %v213 = vld.sshfl [vmem:[#allocation1] sm:$0xff pattern:$0x73625140]
      %v214 = vld.sshfl [vmem:[#allocation1 + $0x8] sm:$0xff pattern:$0x73625140]
      %v216 = vsel %vm172, %v157, 0
      %v218 = vand.u32 %v213, %v179
      %v220 = vand.u32 %v214, %v179
      %222 = vmatpush.bf16.msra.mxu0 0
      %223 = vmatpush.bf16.msra.mxu0 0
      %224 = vmatpush.bf16.msra.mxu0 0
      %225 = vmatpush.bf16.msra.mxu0 0
      %226 = vmatpush.bf16.msra.mxu0 0
      %227 = vmatpush.bf16.msra.mxu0 0
      %228 = vmatpush.bf16.msra.mxu0 0
      %229 = vmatpush.bf16.msra.mxu0 %v218
      %230 = vmatmul.bf16.gmra.mxu0 %v216
      %v231 = vpop.f32.mrf.mxu0
      %v232 = vadd.f32 %v196, %v231
      %v233 = vpop.f32.mrf.mxu0
      %234 = vdwg.mxu0
      %235 = vmatpush.bf16.msra.mxu0 0
      %236 = vmatpush.bf16.msra.mxu0 0
      %237 = vmatpush.bf16.msra.mxu0 0
      %238 = vmatpush.bf16.msra.mxu0 0
      %239 = vmatpush.bf16.msra.mxu0 0
      %240 = vmatpush.bf16.msra.mxu0 0
      %241 = vmatpush.bf16.msra.mxu0 0
      %242 = vmatpush.bf16.msra.mxu0 %v220
      %243 = vmatmul.bf16.gmra.mxu0 %v216
      %v244 = vpop.f32.mrf.mxu0
      %v245 = vadd.f32 %v209, %v244
      %v246 = vpop.f32.mrf.mxu0
      %247 = vdwg.mxu0
      %v248 = vld [vmem:[%s155] sm:$0xf]
      %s249 = scalar_lea.vmem %s1, 8
      %v250 = vld [vmem:[%s249] sm:$0x7]
      %252 = vst [vmem:[#allocation1] ss:$4 sm:$0xff] %v248
      %v253 = vld.sshfl [vmem:[#allocation1] sm:$0xff pattern:$0x73625140]
      %v255 = vld.sshfl [vmem:[#allocation1 + $0x8] sm:$0xff pattern:$0x73625140]
      %257 = vrot.lane.b32.xlu0 %v253, 126
      %v258 = vpop.permute.xlu0 %257
      %259 = vrot.lane.b32.xlu0 %v255, 126
      %v260 = vpop.permute.xlu0 %259
      %vm261 = vcmask 1031168
      %v262 = vsel %vm261, %v258, %v260
      %v264 = vsel %vm172, %v250, 0
      %v267 = vand.u32 %v262, %v179
      %v270 = vand.u32 %v260, %v179
      %272 = vmatpush.bf16.msra.mxu0 0
      %273 = vmatpush.bf16.msra.mxu0 0
      %274 = vmatpush.bf16.msra.mxu0 0
      %275 = vmatpush.bf16.msra.mxu0 0
      %276 = vmatpush.bf16.msra.mxu0 0
      %277 = vmatpush.bf16.msra.mxu0 0
      %278 = vmatpush.bf16.msra.mxu0 0
      %279 = vmatpush.bf16.msra.mxu0 %v267
      %280 = vmatmul.bf16.gmra.mxu0 %v264
      %v281 = vpop.f32.mrf.mxu0
      %v282 = vadd.f32 0.0, %v281
      %v283 = vpop.f32.mrf.mxu0
      %284 = vdwg.mxu0
      %285 = vmatpush.bf16.msra.mxu0 0
      %286 = vmatpush.bf16.msra.mxu0 0
      %287 = vmatpush.bf16.msra.mxu0 0
      %288 = vmatpush.bf16.msra.mxu0 0
      %289 = vmatpush.bf16.msra.mxu0 0
      %290 = vmatpush.bf16.msra.mxu0 0
      %291 = vmatpush.bf16.msra.mxu0 0
      %292 = vmatpush.bf16.msra.mxu0 %v270
      %293 = vmatmul.bf16.gmra.mxu0 %v264
      %v294 = vpop.f32.mrf.mxu0
      %v295 = vadd.f32 0.0, %v294
      %v296 = vpop.f32.mrf.mxu0
      %297 = vdwg.mxu0
      %v298 = vadd.f32 %v232, %v282
      %v299 = vadd.f32 %v245, %v295
      %v300 = vld [vmem:[%s155] sm:$0xf]
      %s301 = scalar_lea.vmem %s1, 12
      %v302 = vld [vmem:[%s301] sm:$0x7]
      %304 = vst [vmem:[#allocation1] ss:$4 sm:$0xff] %v300
      %v305 = vld.sshfl [vmem:[#allocation1] sm:$0xff pattern:$0x73625140]
      %v307 = vld.sshfl [vmem:[#allocation1 + $0x8] sm:$0xff pattern:$0x73625140]
      %309 = vrot.lane.b32.xlu0 %v305, 114
      %v310 = vpop.permute.xlu0 %309
      %311 = vrot.lane.b32.xlu0 %v307, 114
      %v312 = vpop.permute.xlu0 %311
      %vm313 = vcmask 932864
      %v314 = vsel %vm313, %v310, %v312
      %v316 = vsel %vm172, %v302, 0
      %v319 = vand.u32 %v314, %v179
      %v322 = vand.u32 %v312, %v179
      %324 = vmatpush.bf16.msra.mxu0 0
      %325 = vmatpush.bf16.msra.mxu0 0
      %326 = vmatpush.bf16.msra.mxu0 0
      %327 = vmatpush.bf16.msra.mxu0 0
      %328 = vmatpush.bf16.msra.mxu0 0
      %329 = vmatpush.bf16.msra.mxu0 0
      %330 = vmatpush.bf16.msra.mxu0 0
      %331 = vmatpush.bf16.msra.mxu0 %v319
      %332 = vmatmul.bf16.gmra.mxu0 %v316
      %v333 = vpop.f32.mrf.mxu0
      %v334 = vadd.f32 0.0, %v333
      %v335 = vpop.f32.mrf.mxu0
      %336 = vdwg.mxu0
      %337 = vmatpush.bf16.msra.mxu0 0
      %338 = vmatpush.bf16.msra.mxu0 0
      %339 = vmatpush.bf16.msra.mxu0 0
      %340 = vmatpush.bf16.msra.mxu0 0
      %341 = vmatpush.bf16.msra.mxu0 0
      %342 = vmatpush.bf16.msra.mxu0 0
      %343 = vmatpush.bf16.msra.mxu0 0
      %344 = vmatpush.bf16.msra.mxu0 %v322
      %345 = vmatmul.bf16.gmra.mxu0 %v316
      %v346 = vpop.f32.mrf.mxu0
      %v347 = vadd.f32 0.0, %v346
      %v348 = vpop.f32.mrf.mxu0
      %349 = vdwg.mxu0
      %v350 = vadd.f32 %v298, %v334
      %v351 = vadd.f32 %v299, %v347
      %v352 = vld [vmem:[%s155] sm:$0xf]
      %s353 = scalar_lea.vmem %s1, 16
      %v354 = vld [vmem:[%s353] sm:$0x7]
      %356 = vst [vmem:[#allocation1] ss:$4 sm:$0xff] %v352
      %v357 = vld.sshfl [vmem:[#allocation1] sm:$0xff pattern:$0x73625140]
      %v359 = vld.sshfl [vmem:[#allocation1 + $0x8] sm:$0xff pattern:$0x73625140]
      %361 = vrot.lane.b32.xlu0 %v357, 113
      %v362 = vpop.permute.xlu0 %361
      %363 = vrot.lane.b32.xlu0 %v359, 113
      %v364 = vpop.permute.xlu0 %363
      %vm365 = vcmask 924672
      %v366 = vsel %vm365, %v362, %v364
      %v368 = vsel %vm172, %v354, 0
      %v371 = vand.u32 %v366, %v179
      %v374 = vand.u32 %v364, %v179
      %376 = vmatpush.bf16.msra.mxu0 0
      %377 = vmatpush.bf16.msra.mxu0 0
      %378 = vmatpush.bf16.msra.mxu0 0
      %379 = vmatpush.bf16.msra.mxu0 0
      %380 = vmatpush.bf16.msra.mxu0 0
      %381 = vmatpush.bf16.msra.mxu0 0
      %382 = vmatpush.bf16.msra.mxu0 0
      %383 = vmatpush.bf16.msra.mxu0 %v371
      %384 = vmatmul.bf16.gmra.mxu0 %v368
      %v385 = vpop.f32.mrf.mxu0
      %v386 = vadd.f32 0.0, %v385
      %v387 = vpop.f32.mrf.mxu0
      %388 = vdwg.mxu0
      %389 = vmatpush.bf16.msra.mxu0 0
      %390 = vmatpush.bf16.msra.mxu0 0
      %391 = vmatpush.bf16.msra.mxu0 0
      %392 = vmatpush.bf16.msra.mxu0 0
      %393 = vmatpush.bf16.msra.mxu0 0
      %394 = vmatpush.bf16.msra.mxu0 0
      %395 = vmatpush.bf16.msra.mxu0 0
      %396 = vmatpush.bf16.msra.mxu0 %v374
      %397 = vmatmul.bf16.gmra.mxu0 %v368
      %v398 = vpop.f32.mrf.mxu0
      %v399 = vadd.f32 0.0, %v398
      %v400 = vpop.f32.mrf.mxu0
      %401 = vdwg.mxu0
      %v402 = vadd.f32 %v350, %v386
      %v403 = vadd.f32 %v351, %v399
      %v404 = vld [vmem:[%s155] sm:$0xf]
      %s405 = scalar_lea.vmem %s1, 20
      %v406 = vld [vmem:[%s405] sm:$0x7]
      %408 = vst [vmem:[#allocation1] ss:$4 sm:$0xff] %v404
      %v409 = vld.sshfl [vmem:[#allocation1] sm:$0xff pattern:$0x73625140]
      %v411 = vld.sshfl [vmem:[#allocation1 + $0x8] sm:$0xff pattern:$0x73625140]
      %413 = vrot.lane.b32.xlu0 %v409, 112
      %v414 = vpop.permute.xlu0 %413
      %415 = vrot.lane.b32.xlu0 %v411, 112
      %v416 = vpop.permute.xlu0 %415
      %vm417 = vcmask 916480
      %v418 = vsel %vm417, %v414, %v416
      %v420 = vsel %vm172, %v406, 0
      %v423 = vand.u32 %v418, %v179
      %v426 = vand.u32 %v416, %v179
      %428 = vmatpush.bf16.msra.mxu0 0
      %429 = vmatpush.bf16.msra.mxu0 0
      %430 = vmatpush.bf16.msra.mxu0 0
      %431 = vmatpush.bf16.msra.mxu0 0
      %432 = vmatpush.bf16.msra.mxu0 0
      %433 = vmatpush.bf16.msra.mxu0 0
      %434 = vmatpush.bf16.msra.mxu0 0
      %435 = vmatpush.bf16.msra.mxu0 %v423
      %436 = vmatmul.bf16.gmra.mxu0 %v420
      %v437 = vpop.f32.mrf.mxu0
      %v438 = vadd.f32 0.0, %v437
      %v439 = vpop.f32.mrf.mxu0
      %440 = vdwg.mxu0
      %441 = vmatpush.bf16.msra.mxu0 0
      %442 = vmatpush.bf16.msra.mxu0 0
      %443 = vmatpush.bf16.msra.mxu0 0
      %444 = vmatpush.bf16.msra.mxu0 0
      %445 = vmatpush.bf16.msra.mxu0 0
      %446 = vmatpush.bf16.msra.mxu0 0
      %447 = vmatpush.bf16.msra.mxu0 0
      %448 = vmatpush.bf16.msra.mxu0 %v426
      %449 = vmatmul.bf16.gmra.mxu0 %v420
      %v450 = vpop.f32.mrf.mxu0
      %v451 = vadd.f32 0.0, %v450
      %v452 = vpop.f32.mrf.mxu0
      %453 = vdwg.mxu0
      %v454 = vadd.f32 %v402, %v438
      %v455 = vadd.f32 %v403, %v451
      %v456 = vld [vmem:[%s155] sm:$0xf]
      %s457 = scalar_lea.vmem %s1, 24
      %v458 = vld [vmem:[%s457] sm:$0x7]
      %460 = vst [vmem:[#allocation1] ss:$4 sm:$0xff] %v456
      %v461 = vld.sshfl [vmem:[#allocation1] sm:$0xff pattern:$0x73625140]
      %v463 = vld.sshfl [vmem:[#allocation1 + $0x8] sm:$0xff pattern:$0x73625140]
      %465 = vrot.lane.b32.xlu0 %v461, 100
      %v466 = vpop.permute.xlu0 %465
      %467 = vrot.lane.b32.xlu0 %v463, 100
      %v468 = vpop.permute.xlu0 %467
      %vm469 = vcmask 818176
      %v470 = vsel %vm469, %v466, %v468
      %v472 = vsel %vm172, %v458, 0
      %v475 = vand.u32 %v470, %v179
      %v478 = vand.u32 %v468, %v179
      %480 = vmatpush.bf16.msra.mxu0 0
      %481 = vmatpush.bf16.msra.mxu0 0
      %482 = vmatpush.bf16.msra.mxu0 0
      %483 = vmatpush.bf16.msra.mxu0 0
      %484 = vmatpush.bf16.msra.mxu0 0
      %485 = vmatpush.bf16.msra.mxu0 0
      %486 = vmatpush.bf16.msra.mxu0 0
      %487 = vmatpush.bf16.msra.mxu0 %v475
      %488 = vmatmul.bf16.gmra.mxu0 %v472
      %v489 = vpop.f32.mrf.mxu0
      %v490 = vadd.f32 0.0, %v489
      %v491 = vpop.f32.mrf.mxu0
      %492 = vdwg.mxu0
      %493 = vmatpush.bf16.msra.mxu0 0
      %494 = vmatpush.bf16.msra.mxu0 0
      %495 = vmatpush.bf16.msra.mxu0 0
      %496 = vmatpush.bf16.msra.mxu0 0
      %497 = vmatpush.bf16.msra.mxu0 0
      %498 = vmatpush.bf16.msra.mxu0 0
      %499 = vmatpush.bf16.msra.mxu0 0
      %500 = vmatpush.bf16.msra.mxu0 %v478
      %501 = vmatmul.bf16.gmra.mxu0 %v472
      %v502 = vpop.f32.mrf.mxu0
      %v503 = vadd.f32 0.0, %v502
      %v504 = vpop.f32.mrf.mxu0
      %505 = vdwg.mxu0
      %v506 = vadd.f32 %v454, %v490
      %v507 = vadd.f32 %v455, %v503
      %v508 = vld [vmem:[%s155] sm:$0xf]
      %s509 = scalar_lea.vmem %s1, 28
      %v510 = vld [vmem:[%s509] sm:$0x7]
      %512 = vst [vmem:[#allocation1] ss:$4 sm:$0xff] %v508
      %v513 = vld.sshfl [vmem:[#allocation1] sm:$0xff pattern:$0x73625140]
      %v515 = vld.sshfl [vmem:[#allocation1 + $0x8] sm:$0xff pattern:$0x73625140]
      %517 = vrot.lane.b32.xlu0 %v513, 99
      %v518 = vpop.permute.xlu0 %517
      %519 = vrot.lane.b32.xlu0 %v515, 99
      %v520 = vpop.permute.xlu0 %519
      %vm521 = vcmask 809984
      %v522 = vsel %vm521, %v518, %v520
      %v524 = vsel %vm172, %v510, 0
      %v527 = vand.u32 %v522, %v179
      %v530 = vand.u32 %v520, %v179
      %532 = vmatpush.bf16.msra.mxu0 0
      %533 = vmatpush.bf16.msra.mxu0 0
      %534 = vmatpush.bf16.msra.mxu0 0
      %535 = vmatpush.bf16.msra.mxu0 0
      %536 = vmatpush.bf16.msra.mxu0 0
      %537 = vmatpush.bf16.msra.mxu0 0
      %538 = vmatpush.bf16.msra.mxu0 0
      %539 = vmatpush.bf16.msra.mxu0 %v527
      %540 = vmatmul.bf16.gmra.mxu0 %v524
      %v541 = vpop.f32.mrf.mxu0
      %v542 = vadd.f32 0.0, %v541
      %v543 = vpop.f32.mrf.mxu0
      %544 = vdwg.mxu0
      %545 = vmatpush.bf16.msra.mxu0 0
      %546 = vmatpush.bf16.msra.mxu0 0
      %547 = vmatpush.bf16.msra.mxu0 0
      %548 = vmatpush.bf16.msra.mxu0 0
      %549 = vmatpush.bf16.msra.mxu0 0
      %550 = vmatpush.bf16.msra.mxu0 0
      %551 = vmatpush.bf16.msra.mxu0 0
      %552 = vmatpush.bf16.msra.mxu0 %v530
      %553 = vmatmul.bf16.gmra.mxu0 %v524
      %v554 = vpop.f32.mrf.mxu0
      %v555 = vadd.f32 0.0, %v554
      %v556 = vpop.f32.mrf.mxu0
      %557 = vdwg.mxu0
      %v558 = vadd.f32 %v506, %v542
      %v559 = vadd.f32 %v507, %v555
      %v560 = vld [vmem:[%s155] sm:$0xf]
      %s561 = scalar_lea.vmem %s1, 32
      %v562 = vld [vmem:[%s561] sm:$0x7]
      %564 = vst [vmem:[#allocation1] ss:$4 sm:$0xff] %v560
      %v565 = vld.sshfl [vmem:[#allocation1] sm:$0xff pattern:$0x73625140]
      %v567 = vld.sshfl [vmem:[#allocation1 + $0x8] sm:$0xff pattern:$0x73625140]
      %569 = vrot.lane.b32.xlu0 %v565, 98
      %v570 = vpop.permute.xlu0 %569
      %571 = vrot.lane.b32.xlu0 %v567, 98
      %v572 = vpop.permute.xlu0 %571
      %vm573 = vcmask 801792
      %v574 = vsel %vm573, %v570, %v572
      %v576 = vsel %vm172, %v562, 0
      %v579 = vand.u32 %v574, %v179
      %v582 = vand.u32 %v572, %v179
      %584 = vmatpush.bf16.msra.mxu0 0
      %585 = vmatpush.bf16.msra.mxu0 0
      %586 = vmatpush.bf16.msra.mxu0 0
      %587 = vmatpush.bf16.msra.mxu0 0
      %588 = vmatpush.bf16.msra.mxu0 0
      %589 = vmatpush.bf16.msra.mxu0 0
      %590 = vmatpush.bf16.msra.mxu0 0
      %591 = vmatpush.bf16.msra.mxu0 %v579
      %592 = vmatmul.bf16.gmra.mxu0 %v576
      %v593 = vpop.f32.mrf.mxu0
      %v594 = vadd.f32 0.0, %v593
      %v595 = vpop.f32.mrf.mxu0
      %596 = vdwg.mxu0
      %597 = vmatpush.bf16.msra.mxu0 0
      %598 = vmatpush.bf16.msra.mxu0 0
      %599 = vmatpush.bf16.msra.mxu0 0
      %600 = vmatpush.bf16.msra.mxu0 0
      %601 = vmatpush.bf16.msra.mxu0 0
      %602 = vmatpush.bf16.msra.mxu0 0
      %603 = vmatpush.bf16.msra.mxu0 0
      %604 = vmatpush.bf16.msra.mxu0 %v582
      %605 = vmatmul.bf16.gmra.mxu0 %v576
      %v606 = vpop.f32.mrf.mxu0
      %v607 = vadd.f32 0.0, %v606
      %v608 = vpop.f32.mrf.mxu0
      %609 = vdwg.mxu0
      %v610 = vadd.f32 %v558, %v594
      %v611 = vadd.f32 %v559, %v607
      %s612 = sadd.s32 %s14, 1
      %s613 = smul.u32 %s612, 2
      %s614 = smul.addr %s613, 2
      %s615 = scalar_lea.vmem %s0, %s614
      %v616 = vld [vmem:[%s615] sm:$0xf]
      %s617 = scalar_lea.vmem %s1, 36
      %v618 = vld [vmem:[%s617] sm:$0x7]
      %620 = vst [vmem:[#allocation1] ss:$4 sm:$0xff] %v616
      %v621 = vld.sshfl [vmem:[#allocation1] sm:$0xff pattern:$0x73625140]
      %v622 = vld.sshfl [vmem:[#allocation1 + $0x8] sm:$0xff pattern:$0x73625140]
      %v624 = vsel %vm172, %v618, 0
      %v626 = vand.u32 %v621, %v179
      %v628 = vand.u32 %v622, %v179
      %630 = vmatpush.bf16.msra.mxu0 0
      %631 = vmatpush.bf16.msra.mxu0 0
      %632 = vmatpush.bf16.msra.mxu0 0
      %633 = vmatpush.bf16.msra.mxu0 0
      %634 = vmatpush.bf16.msra.mxu0 0
      %635 = vmatpush.bf16.msra.mxu0 0
      %636 = vmatpush.bf16.msra.mxu0 0
      %637 = vmatpush.bf16.msra.mxu0 %v626
      %638 = vmatmul.bf16.gmra.mxu0 %v624
      %v639 = vpop.f32.mrf.mxu0
      %v640 = vadd.f32 0.0, %v639
      %v641 = vpop.f32.mrf.mxu0
      %642 = vdwg.mxu0
      %643 = vmatpush.bf16.msra.mxu0 0
      %644 = vmatpush.bf16.msra.mxu0 0
      %645 = vmatpush.bf16.msra.mxu0 0
      %646 = vmatpush.bf16.msra.mxu0 0
      %647 = vmatpush.bf16.msra.mxu0 0
      %648 = vmatpush.bf16.msra.mxu0 0
      %649 = vmatpush.bf16.msra.mxu0 0
      %650 = vmatpush.bf16.msra.mxu0 %v628
      %651 = vmatmul.bf16.gmra.mxu0 %v624
      %v652 = vpop.f32.mrf.mxu0
      %v653 = vadd.f32 0.0, %v652
      %v654 = vpop.f32.mrf.mxu0
      %655 = vdwg.mxu0
      %v656 = vadd.f32 %v610, %v640
      %v657 = vadd.f32 %v611, %v653
      %v658 = vld [vmem:[%s615] sm:$0xf]
      %s659 = scalar_lea.vmem %s1, 40
      %v660 = vld [vmem:[%s659] sm:$0x7]
      %662 = vst [vmem:[#allocation1] ss:$4 sm:$0xff] %v658
      %v663 = vld.sshfl [vmem:[#allocation1] sm:$0xff pattern:$0x73625140]
      %v665 = vld.sshfl [vmem:[#allocation1 + $0x8] sm:$0xff pattern:$0x73625140]
      %667 = vrot.lane.b32.xlu0 %v663, 127
      %v668 = vpop.permute.xlu0 %667
      %669 = vrot.lane.b32.xlu0 %v665, 127
      %v670 = vpop.permute.xlu0 %669
      %v671 = vsel %vm170, %v668, %v670
      %v673 = vsel %vm172, %v660, 0
      %v676 = vand.u32 %v671, %v179
      %v679 = vand.u32 %v670, %v179
      %681 = vmatpush.bf16.msra.mxu0 0
      %682 = vmatpush.bf16.msra.mxu0 0
      %683 = vmatpush.bf16.msra.mxu0 0
      %684 = vmatpush.bf16.msra.mxu0 0
      %685 = vmatpush.bf16.msra.mxu0 0
      %686 = vmatpush.bf16.msra.mxu0 0
      %687 = vmatpush.bf16.msra.mxu0 0
      %688 = vmatpush.bf16.msra.mxu0 %v676
      %689 = vmatmul.bf16.gmra.mxu0 %v673
      %v690 = vpop.f32.mrf.mxu0
      %v691 = vadd.f32 0.0, %v690
      %v692 = vpop.f32.mrf.mxu0
      %693 = vdwg.mxu0
      %694 = vmatpush.bf16.msra.mxu0 0
      %695 = vmatpush.bf16.msra.mxu0 0
      %696 = vmatpush.bf16.msra.mxu0 0
      %697 = vmatpush.bf16.msra.mxu0 0
      %698 = vmatpush.bf16.msra.mxu0 0
      %699 = vmatpush.bf16.msra.mxu0 0
      %700 = vmatpush.bf16.msra.mxu0 0
      %701 = vmatpush.bf16.msra.mxu0 %v679
      %702 = vmatmul.bf16.gmra.mxu0 %v673
      %v703 = vpop.f32.mrf.mxu0
      %v704 = vadd.f32 0.0, %v703
      %v705 = vpop.f32.mrf.mxu0
      %706 = vdwg.mxu0
      %v707 = vadd.f32 %v656, %v691
      %v708 = vadd.f32 %v657, %v704
      %v709 = vld [vmem:[%s615] sm:$0xf]
      %s710 = scalar_lea.vmem %s1, 44
      %v711 = vld [vmem:[%s710] sm:$0x7]
      %713 = vst [vmem:[#allocation1] ss:$4 sm:$0xff] %v709
      %v714 = vld.sshfl [vmem:[#allocation1] sm:$0xff pattern:$0x73625140]
      %v716 = vld.sshfl [vmem:[#allocation1 + $0x8] sm:$0xff pattern:$0x73625140]
      %718 = vrot.lane.b32.xlu0 %v714, 126
      %v719 = vpop.permute.xlu0 %718
      %720 = vrot.lane.b32.xlu0 %v716, 126
      %v721 = vpop.permute.xlu0 %720
      %v722 = vsel %vm261, %v719, %v721
      %v724 = vsel %vm172, %v711, 0
      %v727 = vand.u32 %v722, %v179
      %v730 = vand.u32 %v721, %v179
      %732 = vmatpush.bf16.msra.mxu0 0
      %733 = vmatpush.bf16.msra.mxu0 0
      %734 = vmatpush.bf16.msra.mxu0 0
      %735 = vmatpush.bf16.msra.mxu0 0
      %736 = vmatpush.bf16.msra.mxu0 0
      %737 = vmatpush.bf16.msra.mxu0 0
      %738 = vmatpush.bf16.msra.mxu0 0
      %739 = vmatpush.bf16.msra.mxu0 %v727
      %740 = vmatmul.bf16.gmra.mxu0 %v724
      %v741 = vpop.f32.mrf.mxu0
      %v742 = vadd.f32 0.0, %v741
      %v743 = vpop.f32.mrf.mxu0
      %744 = vdwg.mxu0
      %745 = vmatpush.bf16.msra.mxu0 0
      %746 = vmatpush.bf16.msra.mxu0 0
      %747 = vmatpush.bf16.msra.mxu0 0
      %748 = vmatpush.bf16.msra.mxu0 0
      %749 = vmatpush.bf16.msra.mxu0 0
      %750 = vmatpush.bf16.msra.mxu0 0
      %751 = vmatpush.bf16.msra.mxu0 0
      %752 = vmatpush.bf16.msra.mxu0 %v730
      %753 = vmatmul.bf16.gmra.mxu0 %v724
      %v754 = vpop.f32.mrf.mxu0
      %v755 = vadd.f32 0.0, %v754
      %v756 = vpop.f32.mrf.mxu0
      %757 = vdwg.mxu0
      %v758 = vadd.f32 %v707, %v742
      %v759 = vadd.f32 %v708, %v755
      %v760 = vld [vmem:[%s615] sm:$0xf]
      %s761 = scalar_lea.vmem %s1, 48
      %v762 = vld [vmem:[%s761] sm:$0x7]
      %764 = vst [vmem:[#allocation1] ss:$4 sm:$0xff] %v760
      %v765 = vld.sshfl [vmem:[#allocation1] sm:$0xff pattern:$0x73625140]
      %v767 = vld.sshfl [vmem:[#allocation1 + $0x8] sm:$0xff pattern:$0x73625140]
      %769 = vrot.lane.b32.xlu0 %v765, 114
      %v770 = vpop.permute.xlu0 %769
      %771 = vrot.lane.b32.xlu0 %v767, 114
      %v772 = vpop.permute.xlu0 %771
      %v773 = vsel %vm313, %v770, %v772
      %v775 = vsel %vm172, %v762, 0
      %v778 = vand.u32 %v773, %v179
      %v781 = vand.u32 %v772, %v179
      %783 = vmatpush.bf16.msra.mxu0 0
      %784 = vmatpush.bf16.msra.mxu0 0
      %785 = vmatpush.bf16.msra.mxu0 0
      %786 = vmatpush.bf16.msra.mxu0 0
      %787 = vmatpush.bf16.msra.mxu0 0
      %788 = vmatpush.bf16.msra.mxu0 0
      %789 = vmatpush.bf16.msra.mxu0 0
      %790 = vmatpush.bf16.msra.mxu0 %v778
      %791 = vmatmul.bf16.gmra.mxu0 %v775
      %v792 = vpop.f32.mrf.mxu0
      %v793 = vadd.f32 0.0, %v792
      %v794 = vpop.f32.mrf.mxu0
      %795 = vdwg.mxu0
      %796 = vmatpush.bf16.msra.mxu0 0
      %797 = vmatpush.bf16.msra.mxu0 0
      %798 = vmatpush.bf16.msra.mxu0 0
      %799 = vmatpush.bf16.msra.mxu0 0
      %800 = vmatpush.bf16.msra.mxu0 0
      %801 = vmatpush.bf16.msra.mxu0 0
      %802 = vmatpush.bf16.msra.mxu0 0
      %803 = vmatpush.bf16.msra.mxu0 %v781
      %804 = vmatmul.bf16.gmra.mxu0 %v775
      %v805 = vpop.f32.mrf.mxu0
      %v806 = vadd.f32 0.0, %v805
      %v807 = vpop.f32.mrf.mxu0
      %808 = vdwg.mxu0
      %v809 = vadd.f32 %v758, %v793
      %v810 = vadd.f32 %v759, %v806
      %v811 = vld [vmem:[%s615] sm:$0xf]
      %s812 = scalar_lea.vmem %s1, 52
      %v813 = vld [vmem:[%s812] sm:$0x7]
      %815 = vst [vmem:[#allocation1] ss:$4 sm:$0xff] %v811
      %v816 = vld.sshfl [vmem:[#allocation1] sm:$0xff pattern:$0x73625140]
      %v818 = vld.sshfl [vmem:[#allocation1 + $0x8] sm:$0xff pattern:$0x73625140]
      %820 = vrot.lane.b32.xlu0 %v816, 113
      %v821 = vpop.permute.xlu0 %820
      %822 = vrot.lane.b32.xlu0 %v818, 113
      %v823 = vpop.permute.xlu0 %822
      %v824 = vsel %vm365, %v821, %v823
      %v826 = vsel %vm172, %v813, 0
      %v829 = vand.u32 %v824, %v179
      %v832 = vand.u32 %v823, %v179
      %834 = vmatpush.bf16.msra.mxu0 0
      %835 = vmatpush.bf16.msra.mxu0 0
      %836 = vmatpush.bf16.msra.mxu0 0
      %837 = vmatpush.bf16.msra.mxu0 0
      %838 = vmatpush.bf16.msra.mxu0 0
      %839 = vmatpush.bf16.msra.mxu0 0
      %840 = vmatpush.bf16.msra.mxu0 0
      %841 = vmatpush.bf16.msra.mxu0 %v829
      %842 = vmatmul.bf16.gmra.mxu0 %v826
      %v843 = vpop.f32.mrf.mxu0
      %v844 = vadd.f32 0.0, %v843
      %v845 = vpop.f32.mrf.mxu0
      %846 = vdwg.mxu0
      %847 = vmatpush.bf16.msra.mxu0 0
      %848 = vmatpush.bf16.msra.mxu0 0
      %849 = vmatpush.bf16.msra.mxu0 0
      %850 = vmatpush.bf16.msra.mxu0 0
      %851 = vmatpush.bf16.msra.mxu0 0
      %852 = vmatpush.bf16.msra.mxu0 0
      %853 = vmatpush.bf16.msra.mxu0 0
      %854 = vmatpush.bf16.msra.mxu0 %v832
      %855 = vmatmul.bf16.gmra.mxu0 %v826
      %v856 = vpop.f32.mrf.mxu0
      %v857 = vadd.f32 0.0, %v856
      %v858 = vpop.f32.mrf.mxu0
      %859 = vdwg.mxu0
      %v860 = vadd.f32 %v809, %v844
      %v861 = vadd.f32 %v810, %v857
      %v862 = vld [vmem:[%s615] sm:$0xf]
      %s863 = scalar_lea.vmem %s1, 56
      %v864 = vld [vmem:[%s863] sm:$0x7]
      %866 = vst [vmem:[#allocation1] ss:$4 sm:$0xff] %v862
      %v867 = vld.sshfl [vmem:[#allocation1] sm:$0xff pattern:$0x73625140]
      %v869 = vld.sshfl [vmem:[#allocation1 + $0x8] sm:$0xff pattern:$0x73625140]
      %871 = vrot.lane.b32.xlu0 %v867, 112
      %v872 = vpop.permute.xlu0 %871
      %873 = vrot.lane.b32.xlu0 %v869, 112
      %v874 = vpop.permute.xlu0 %873
      %v875 = vsel %vm417, %v872, %v874
      %v877 = vsel %vm172, %v864, 0
      %v880 = vand.u32 %v875, %v179
      %v883 = vand.u32 %v874, %v179
      %885 = vmatpush.bf16.msra.mxu0 0
      %886 = vmatpush.bf16.msra.mxu0 0
      %887 = vmatpush.bf16.msra.mxu0 0
      %888 = vmatpush.bf16.msra.mxu0 0
      %889 = vmatpush.bf16.msra.mxu0 0
      %890 = vmatpush.bf16.msra.mxu0 0
      %891 = vmatpush.bf16.msra.mxu0 0
      %892 = vmatpush.bf16.msra.mxu0 %v880
      %893 = vmatmul.bf16.gmra.mxu0 %v877
      %v894 = vpop.f32.mrf.mxu0
      %v895 = vadd.f32 0.0, %v894
      %v896 = vpop.f32.mrf.mxu0
      %897 = vdwg.mxu0
      %898 = vmatpush.bf16.msra.mxu0 0
      %899 = vmatpush.bf16.msra.mxu0 0
      %900 = vmatpush.bf16.msra.mxu0 0
      %901 = vmatpush.bf16.msra.mxu0 0
      %902 = vmatpush.bf16.msra.mxu0 0
      %903 = vmatpush.bf16.msra.mxu0 0
      %904 = vmatpush.bf16.msra.mxu0 0
      %905 = vmatpush.bf16.msra.mxu0 %v883
      %906 = vmatmul.bf16.gmra.mxu0 %v877
      %v907 = vpop.f32.mrf.mxu0
      %v908 = vadd.f32 0.0, %v907
      %v909 = vpop.f32.mrf.mxu0
      %910 = vdwg.mxu0
      %v911 = vadd.f32 %v860, %v895
      %v912 = vadd.f32 %v861, %v908
      %v913 = vld [vmem:[%s615] sm:$0xf]
      %s914 = scalar_lea.vmem %s1, 60
      %v915 = vld [vmem:[%s914] sm:$0x7]
      %917 = vst [vmem:[#allocation1] ss:$4 sm:$0xff] %v913
      %v918 = vld.sshfl [vmem:[#allocation1] sm:$0xff pattern:$0x73625140]
      %v920 = vld.sshfl [vmem:[#allocation1 + $0x8] sm:$0xff pattern:$0x73625140]
      %922 = vrot.lane.b32.xlu0 %v918, 100
      %v923 = vpop.permute.xlu0 %922
      %924 = vrot.lane.b32.xlu0 %v920, 100
      %v925 = vpop.permute.xlu0 %924
      %v926 = vsel %vm469, %v923, %v925
      %v928 = vsel %vm172, %v915, 0
      %v931 = vand.u32 %v926, %v179
      %v934 = vand.u32 %v925, %v179
      %936 = vmatpush.bf16.msra.mxu0 0
      %937 = vmatpush.bf16.msra.mxu0 0
      %938 = vmatpush.bf16.msra.mxu0 0
      %939 = vmatpush.bf16.msra.mxu0 0
      %940 = vmatpush.bf16.msra.mxu0 0
      %941 = vmatpush.bf16.msra.mxu0 0
      %942 = vmatpush.bf16.msra.mxu0 0
      %943 = vmatpush.bf16.msra.mxu0 %v931
      %944 = vmatmul.bf16.gmra.mxu0 %v928
      %v945 = vpop.f32.mrf.mxu0
      %v946 = vadd.f32 0.0, %v945
      %v947 = vpop.f32.mrf.mxu0
      %948 = vdwg.mxu0
      %949 = vmatpush.bf16.msra.mxu0 0
      %950 = vmatpush.bf16.msra.mxu0 0
      %951 = vmatpush.bf16.msra.mxu0 0
      %952 = vmatpush.bf16.msra.mxu0 0
      %953 = vmatpush.bf16.msra.mxu0 0
      %954 = vmatpush.bf16.msra.mxu0 0
      %955 = vmatpush.bf16.msra.mxu0 0
      %956 = vmatpush.bf16.msra.mxu0 %v934
      %957 = vmatmul.bf16.gmra.mxu0 %v928
      %v958 = vpop.f32.mrf.mxu0
      %v959 = vadd.f32 0.0, %v958
      %v960 = vpop.f32.mrf.mxu0
      %961 = vdwg.mxu0
      %v962 = vadd.f32 %v911, %v946
      %v963 = vadd.f32 %v912, %v959
      %v964 = vld [vmem:[%s615] sm:$0xf]
      %s965 = scalar_lea.vmem %s1, 64
      %v966 = vld [vmem:[%s965] sm:$0x7]
      %968 = vst [vmem:[#allocation1] ss:$4 sm:$0xff] %v964
      %v969 = vld.sshfl [vmem:[#allocation1] sm:$0xff pattern:$0x73625140]
      %v971 = vld.sshfl [vmem:[#allocation1 + $0x8] sm:$0xff pattern:$0x73625140]
      %973 = vrot.lane.b32.xlu0 %v969, 99
      %v974 = vpop.permute.xlu0 %973
      %975 = vrot.lane.b32.xlu0 %v971, 99
      %v976 = vpop.permute.xlu0 %975
      %v977 = vsel %vm521, %v974, %v976
      %v979 = vsel %vm172, %v966, 0
      %v982 = vand.u32 %v977, %v179
      %v985 = vand.u32 %v976, %v179
      %987 = vmatpush.bf16.msra.mxu0 0
      %988 = vmatpush.bf16.msra.mxu0 0
      %989 = vmatpush.bf16.msra.mxu0 0
      %990 = vmatpush.bf16.msra.mxu0 0
      %991 = vmatpush.bf16.msra.mxu0 0
      %992 = vmatpush.bf16.msra.mxu0 0
      %993 = vmatpush.bf16.msra.mxu0 0
      %994 = vmatpush.bf16.msra.mxu0 %v982
      %995 = vmatmul.bf16.gmra.mxu0 %v979
      %v996 = vpop.f32.mrf.mxu0
      %v997 = vadd.f32 0.0, %v996
      %v998 = vpop.f32.mrf.mxu0
      %999 = vdwg.mxu0
      %1000 = vmatpush.bf16.msra.mxu0 0
      %1001 = vmatpush.bf16.msra.mxu0 0
      %1002 = vmatpush.bf16.msra.mxu0 0
      %1003 = vmatpush.bf16.msra.mxu0 0
      %1004 = vmatpush.bf16.msra.mxu0 0
      %1005 = vmatpush.bf16.msra.mxu0 0
      %1006 = vmatpush.bf16.msra.mxu0 0
      %1007 = vmatpush.bf16.msra.mxu0 %v985
      %1008 = vmatmul.bf16.gmra.mxu0 %v979
      %v1009 = vpop.f32.mrf.mxu0
      %v1010 = vadd.f32 0.0, %v1009
      %v1011 = vpop.f32.mrf.mxu0
      %1012 = vdwg.mxu0
      %v1013 = vadd.f32 %v962, %v997
      %v1014 = vadd.f32 %v963, %v1010
      %v1015 = vld [vmem:[%s615] sm:$0xf]
      %s1016 = scalar_lea.vmem %s1, 68
      %v1017 = vld [vmem:[%s1016] sm:$0x7]
      %1019 = vst [vmem:[#allocation1] ss:$4 sm:$0xff] %v1015
      %v1020 = vld.sshfl [vmem:[#allocation1] sm:$0xff pattern:$0x73625140]
      %v1022 = vld.sshfl [vmem:[#allocation1 + $0x8] sm:$0xff pattern:$0x73625140]
      %1024 = vrot.lane.b32.xlu0 %v1020, 98
      %v1025 = vpop.permute.xlu0 %1024
      %1026 = vrot.lane.b32.xlu0 %v1022, 98
      %v1027 = vpop.permute.xlu0 %1026
      %v1028 = vsel %vm573, %v1025, %v1027
      %v1030 = vsel %vm172, %v1017, 0
      %v1033 = vand.u32 %v1028, %v179
      %v1036 = vand.u32 %v1027, %v179
      %1038 = vmatpush.bf16.msra.mxu0 0
      %1039 = vmatpush.bf16.msra.mxu0 0
      %1040 = vmatpush.bf16.msra.mxu0 0
      %1041 = vmatpush.bf16.msra.mxu0 0
      %1042 = vmatpush.bf16.msra.mxu0 0
      %1043 = vmatpush.bf16.msra.mxu0 0
      %1044 = vmatpush.bf16.msra.mxu0 0
      %1045 = vmatpush.bf16.msra.mxu0 %v1033
      %1046 = vmatmul.bf16.gmra.mxu0 %v1030
      %v1047 = vpop.f32.mrf.mxu0
      %v1048 = vadd.f32 0.0, %v1047
      %v1049 = vpop.f32.mrf.mxu0
      %1050 = vdwg.mxu0
      %1051 = vmatpush.bf16.msra.mxu0 0
      %1052 = vmatpush.bf16.msra.mxu0 0
      %1053 = vmatpush.bf16.msra.mxu0 0
      %1054 = vmatpush.bf16.msra.mxu0 0
      %1055 = vmatpush.bf16.msra.mxu0 0
      %1056 = vmatpush.bf16.msra.mxu0 0
      %1057 = vmatpush.bf16.msra.mxu0 0
      %1058 = vmatpush.bf16.msra.mxu0 %v1036
      %1059 = vmatmul.bf16.gmra.mxu0 %v1030
      %v1060 = vpop.f32.mrf.mxu0
      %v1061 = vadd.f32 0.0, %v1060
      %v1062 = vpop.f32.mrf.mxu0
      %1063 = vdwg.mxu0
      %v1064 = vadd.f32 %v1013, %v1048
      %v1065 = vadd.f32 %v1014, %v1061
      %s1066 = sadd.s32 %s14, 2
      %s1067 = smul.u32 %s1066, 2
      %s1068 = smul.addr %s1067, 2
      %s1069 = scalar_lea.vmem %s0, %s1068
      %v1070 = vld [vmem:[%s1069] sm:$0xf]
      %s1071 = scalar_lea.vmem %s1, 72
      %v1072 = vld [vmem:[%s1071] sm:$0x7]
      %1074 = vst [vmem:[#allocation1] ss:$4 sm:$0xff] %v1070
      %v1075 = vld.sshfl [vmem:[#allocation1] sm:$0xff pattern:$0x73625140]
      %v1076 = vld.sshfl [vmem:[#allocation1 + $0x8] sm:$0xff pattern:$0x73625140]
      %v1078 = vsel %vm172, %v1072, 0
      %v1080 = vand.u32 %v1075, %v179
      %v1082 = vand.u32 %v1076, %v179
      %1084 = vmatpush.bf16.msra.mxu0 0
      %1085 = vmatpush.bf16.msra.mxu0 0
      %1086 = vmatpush.bf16.msra.mxu0 0
      %1087 = vmatpush.bf16.msra.mxu0 0
      %1088 = vmatpush.bf16.msra.mxu0 0
      %1089 = vmatpush.bf16.msra.mxu0 0
      %1090 = vmatpush.bf16.msra.mxu0 0
      %1091 = vmatpush.bf16.msra.mxu0 %v1080
      %1092 = vmatmul.bf16.gmra.mxu0 %v1078
      %v1093 = vpop.f32.mrf.mxu0
      %v1094 = vadd.f32 0.0, %v1093
      %v1095 = vpop.f32.mrf.mxu0
      %1096 = vdwg.mxu0
      %1097 = vmatpush.bf16.msra.mxu0 0
      %1098 = vmatpush.bf16.msra.mxu0 0
      %1099 = vmatpush.bf16.msra.mxu0 0
      %1100 = vmatpush.bf16.msra.mxu0 0
      %1101 = vmatpush.bf16.msra.mxu0 0
      %1102 = vmatpush.bf16.msra.mxu0 0
      %1103 = vmatpush.bf16.msra.mxu0 0
      %1104 = vmatpush.bf16.msra.mxu0 %v1082
      %1105 = vmatmul.bf16.gmra.mxu0 %v1078
      %v1106 = vpop.f32.mrf.mxu0
      %v1107 = vadd.f32 0.0, %v1106
      %v1108 = vpop.f32.mrf.mxu0
      %1109 = vdwg.mxu0
      %v1110 = vadd.f32 %v1064, %v1094
      %v1111 = vadd.f32 %v1065, %v1107
      %v1112 = vld [vmem:[%s1069] sm:$0xf]
      %s1113 = scalar_lea.vmem %s1, 76
      %v1114 = vld [vmem:[%s1113] sm:$0x7]
      %1116 = vst [vmem:[#allocation1] ss:$4 sm:$0xff] %v1112
      %v1117 = vld.sshfl [vmem:[#allocation1] sm:$0xff pattern:$0x73625140]
      %v1119 = vld.sshfl [vmem:[#allocation1 + $0x8] sm:$0xff pattern:$0x73625140]
      %1121 = vrot.lane.b32.xlu0 %v1117, 127
      %v1122 = vpop.permute.xlu0 %1121
      %1123 = vrot.lane.b32.xlu0 %v1119, 127
      %v1124 = vpop.permute.xlu0 %1123
      %v1125 = vsel %vm170, %v1122, %v1124
      %v1127 = vsel %vm172, %v1114, 0
      %v1130 = vand.u32 %v1125, %v179
      %v1133 = vand.u32 %v1124, %v179
      %1135 = vmatpush.bf16.msra.mxu0 0
      %1136 = vmatpush.bf16.msra.mxu0 0
      %1137 = vmatpush.bf16.msra.mxu0 0
      %1138 = vmatpush.bf16.msra.mxu0 0
      %1139 = vmatpush.bf16.msra.mxu0 0
      %1140 = vmatpush.bf16.msra.mxu0 0
      %1141 = vmatpush.bf16.msra.mxu0 0
      %1142 = vmatpush.bf16.msra.mxu0 %v1130
      %1143 = vmatmul.bf16.gmra.mxu0 %v1127
      %v1144 = vpop.f32.mrf.mxu0
      %v1145 = vadd.f32 0.0, %v1144
      %v1146 = vpop.f32.mrf.mxu0
      %1147 = vdwg.mxu0
      %1148 = vmatpush.bf16.msra.mxu0 0
      %1149 = vmatpush.bf16.msra.mxu0 0
      %1150 = vmatpush.bf16.msra.mxu0 0
      %1151 = vmatpush.bf16.msra.mxu0 0
      %1152 = vmatpush.bf16.msra.mxu0 0
      %1153 = vmatpush.bf16.msra.mxu0 0
      %1154 = vmatpush.bf16.msra.mxu0 0
      %1155 = vmatpush.bf16.msra.mxu0 %v1133
      %1156 = vmatmul.bf16.gmra.mxu0 %v1127
      %v1157 = vpop.f32.mrf.mxu0
      %v1158 = vadd.f32 0.0, %v1157
      %v1159 = vpop.f32.mrf.mxu0
      %1160 = vdwg.mxu0
      %v1161 = vadd.f32 %v1110, %v1145
      %v1162 = vadd.f32 %v1111, %v1158
      %v1163 = vld [vmem:[%s1069] sm:$0xf]
      %s1164 = scalar_lea.vmem %s1, 80
      %v1165 = vld [vmem:[%s1164] sm:$0x7]
      %1167 = vst [vmem:[#allocation1] ss:$4 sm:$0xff] %v1163
      %v1168 = vld.sshfl [vmem:[#allocation1] sm:$0xff pattern:$0x73625140]
      %v1170 = vld.sshfl [vmem:[#allocation1 + $0x8] sm:$0xff pattern:$0x73625140]
      %1172 = vrot.lane.b32.xlu0 %v1168, 126
      %v1173 = vpop.permute.xlu0 %1172
      %1174 = vrot.lane.b32.xlu0 %v1170, 126
      %v1175 = vpop.permute.xlu0 %1174
      %v1176 = vsel %vm261, %v1173, %v1175
      %v1178 = vsel %vm172, %v1165, 0
      %v1181 = vand.u32 %v1176, %v179
      %v1184 = vand.u32 %v1175, %v179
      %1186 = vmatpush.bf16.msra.mxu0 0
      %1187 = vmatpush.bf16.msra.mxu0 0
      %1188 = vmatpush.bf16.msra.mxu0 0
      %1189 = vmatpush.bf16.msra.mxu0 0
      %1190 = vmatpush.bf16.msra.mxu0 0
      %1191 = vmatpush.bf16.msra.mxu0 0
      %1192 = vmatpush.bf16.msra.mxu0 0
      %1193 = vmatpush.bf16.msra.mxu0 %v1181
      %1194 = vmatmul.bf16.gmra.mxu0 %v1178
      %v1195 = vpop.f32.mrf.mxu0
      %v1196 = vadd.f32 0.0, %v1195
      %v1197 = vpop.f32.mrf.mxu0
      %1198 = vdwg.mxu0
      %1199 = vmatpush.bf16.msra.mxu0 0
      %1200 = vmatpush.bf16.msra.mxu0 0
      %1201 = vmatpush.bf16.msra.mxu0 0
      %1202 = vmatpush.bf16.msra.mxu0 0
      %1203 = vmatpush.bf16.msra.mxu0 0
      %1204 = vmatpush.bf16.msra.mxu0 0
      %1205 = vmatpush.bf16.msra.mxu0 0
      %1206 = vmatpush.bf16.msra.mxu0 %v1184
      %1207 = vmatmul.bf16.gmra.mxu0 %v1178
      %v1208 = vpop.f32.mrf.mxu0
      %v1209 = vadd.f32 0.0, %v1208
      %v1210 = vpop.f32.mrf.mxu0
      %1211 = vdwg.mxu0
      %v1212 = vadd.f32 %v1161, %v1196
      %v1213 = vadd.f32 %v1162, %v1209
      %v1214 = vld [vmem:[%s1069] sm:$0xf]
      %s1215 = scalar_lea.vmem %s1, 84
      %v1216 = vld [vmem:[%s1215] sm:$0x7]
      %1218 = vst [vmem:[#allocation1] ss:$4 sm:$0xff] %v1214
      %v1219 = vld.sshfl [vmem:[#allocation1] sm:$0xff pattern:$0x73625140]
      %v1221 = vld.sshfl [vmem:[#allocation1 + $0x8] sm:$0xff pattern:$0x73625140]
      %1223 = vrot.lane.b32.xlu0 %v1219, 114
      %v1224 = vpop.permute.xlu0 %1223
      %1225 = vrot.lane.b32.xlu0 %v1221, 114
      %v1226 = vpop.permute.xlu0 %1225
      %v1227 = vsel %vm313, %v1224, %v1226
      %v1229 = vsel %vm172, %v1216, 0
      %v1232 = vand.u32 %v1227, %v179
      %v1235 = vand.u32 %v1226, %v179
      %1237 = vmatpush.bf16.msra.mxu0 0
      %1238 = vmatpush.bf16.msra.mxu0 0
      %1239 = vmatpush.bf16.msra.mxu0 0
      %1240 = vmatpush.bf16.msra.mxu0 0
      %1241 = vmatpush.bf16.msra.mxu0 0
      %1242 = vmatpush.bf16.msra.mxu0 0
      %1243 = vmatpush.bf16.msra.mxu0 0
      %1244 = vmatpush.bf16.msra.mxu0 %v1232
      %1245 = vmatmul.bf16.gmra.mxu0 %v1229
      %v1246 = vpop.f32.mrf.mxu0
      %v1247 = vadd.f32 0.0, %v1246
      %v1248 = vpop.f32.mrf.mxu0
      %1249 = vdwg.mxu0
      %1250 = vmatpush.bf16.msra.mxu0 0
      %1251 = vmatpush.bf16.msra.mxu0 0
      %1252 = vmatpush.bf16.msra.mxu0 0
      %1253 = vmatpush.bf16.msra.mxu0 0
      %1254 = vmatpush.bf16.msra.mxu0 0
      %1255 = vmatpush.bf16.msra.mxu0 0
      %1256 = vmatpush.bf16.msra.mxu0 0
      %1257 = vmatpush.bf16.msra.mxu0 %v1235
      %1258 = vmatmul.bf16.gmra.mxu0 %v1229
      %v1259 = vpop.f32.mrf.mxu0
      %v1260 = vadd.f32 0.0, %v1259
      %v1261 = vpop.f32.mrf.mxu0
      %1262 = vdwg.mxu0
      %v1263 = vadd.f32 %v1212, %v1247
      %v1264 = vadd.f32 %v1213, %v1260
      %v1265 = vld [vmem:[%s1069] sm:$0xf]
      %s1266 = scalar_lea.vmem %s1, 88
      %v1267 = vld [vmem:[%s1266] sm:$0x7]
      %1269 = vst [vmem:[#allocation1] ss:$4 sm:$0xff] %v1265
      %v1270 = vld.sshfl [vmem:[#allocation1] sm:$0xff pattern:$0x73625140]
      %v1272 = vld.sshfl [vmem:[#allocation1 + $0x8] sm:$0xff pattern:$0x73625140]
      %1274 = vrot.lane.b32.xlu0 %v1270, 113
      %v1275 = vpop.permute.xlu0 %1274
      %1276 = vrot.lane.b32.xlu0 %v1272, 113
      %v1277 = vpop.permute.xlu0 %1276
      %v1278 = vsel %vm365, %v1275, %v1277
      %v1280 = vsel %vm172, %v1267, 0
      %v1283 = vand.u32 %v1278, %v179
      %v1286 = vand.u32 %v1277, %v179
      %1288 = vmatpush.bf16.msra.mxu0 0
      %1289 = vmatpush.bf16.msra.mxu0 0
      %1290 = vmatpush.bf16.msra.mxu0 0
      %1291 = vmatpush.bf16.msra.mxu0 0
      %1292 = vmatpush.bf16.msra.mxu0 0
      %1293 = vmatpush.bf16.msra.mxu0 0
      %1294 = vmatpush.bf16.msra.mxu0 0
      %1295 = vmatpush.bf16.msra.mxu0 %v1283
      %1296 = vmatmul.bf16.gmra.mxu0 %v1280
      %v1297 = vpop.f32.mrf.mxu0
      %v1298 = vadd.f32 0.0, %v1297
      %v1299 = vpop.f32.mrf.mxu0
      %1300 = vdwg.mxu0
      %1301 = vmatpush.bf16.msra.mxu0 0
      %1302 = vmatpush.bf16.msra.mxu0 0
      %1303 = vmatpush.bf16.msra.mxu0 0
      %1304 = vmatpush.bf16.msra.mxu0 0
      %1305 = vmatpush.bf16.msra.mxu0 0
      %1306 = vmatpush.bf16.msra.mxu0 0
      %1307 = vmatpush.bf16.msra.mxu0 0
      %1308 = vmatpush.bf16.msra.mxu0 %v1286
      %1309 = vmatmul.bf16.gmra.mxu0 %v1280
      %v1310 = vpop.f32.mrf.mxu0
      %v1311 = vadd.f32 0.0, %v1310
      %v1312 = vpop.f32.mrf.mxu0
      %1313 = vdwg.mxu0
      %v1314 = vadd.f32 %v1263, %v1298
      %v1315 = vadd.f32 %v1264, %v1311
      %v1316 = vld [vmem:[%s1069] sm:$0xf]
      %s1317 = scalar_lea.vmem %s1, 92
      %v1318 = vld [vmem:[%s1317] sm:$0x7]
      %1320 = vst [vmem:[#allocation1] ss:$4 sm:$0xff] %v1316
      %v1321 = vld.sshfl [vmem:[#allocation1] sm:$0xff pattern:$0x73625140]
      %v1323 = vld.sshfl [vmem:[#allocation1 + $0x8] sm:$0xff pattern:$0x73625140]
      %1325 = vrot.lane.b32.xlu0 %v1321, 112
      %v1326 = vpop.permute.xlu0 %1325
      %1327 = vrot.lane.b32.xlu0 %v1323, 112
      %v1328 = vpop.permute.xlu0 %1327
      %v1329 = vsel %vm417, %v1326, %v1328
      %v1331 = vsel %vm172, %v1318, 0
      %v1334 = vand.u32 %v1329, %v179
      %v1337 = vand.u32 %v1328, %v179
      %1339 = vmatpush.bf16.msra.mxu0 0
      %1340 = vmatpush.bf16.msra.mxu0 0
      %1341 = vmatpush.bf16.msra.mxu0 0
      %1342 = vmatpush.bf16.msra.mxu0 0
      %1343 = vmatpush.bf16.msra.mxu0 0
      %1344 = vmatpush.bf16.msra.mxu0 0
      %1345 = vmatpush.bf16.msra.mxu0 0
      %1346 = vmatpush.bf16.msra.mxu0 %v1334
      %1347 = vmatmul.bf16.gmra.mxu0 %v1331
      %v1348 = vpop.f32.mrf.mxu0
      %v1349 = vadd.f32 0.0, %v1348
      %v1350 = vpop.f32.mrf.mxu0
      %1351 = vdwg.mxu0
      %1352 = vmatpush.bf16.msra.mxu0 0
      %1353 = vmatpush.bf16.msra.mxu0 0
      %1354 = vmatpush.bf16.msra.mxu0 0
      %1355 = vmatpush.bf16.msra.mxu0 0
      %1356 = vmatpush.bf16.msra.mxu0 0
      %1357 = vmatpush.bf16.msra.mxu0 0
      %1358 = vmatpush.bf16.msra.mxu0 0
      %1359 = vmatpush.bf16.msra.mxu0 %v1337
      %1360 = vmatmul.bf16.gmra.mxu0 %v1331
      %v1361 = vpop.f32.mrf.mxu0
      %v1362 = vadd.f32 0.0, %v1361
      %v1363 = vpop.f32.mrf.mxu0
      %1364 = vdwg.mxu0
      %v1365 = vadd.f32 %v1314, %v1349
      %v1366 = vadd.f32 %v1315, %v1362
      %v1367 = vld [vmem:[%s1069] sm:$0xf]
      %s1368 = scalar_lea.vmem %s1, 96
      %v1369 = vld [vmem:[%s1368] sm:$0x7]
      %1371 = vst [vmem:[#allocation1] ss:$4 sm:$0xff] %v1367
      %v1372 = vld.sshfl [vmem:[#allocation1] sm:$0xff pattern:$0x73625140]
      %v1374 = vld.sshfl [vmem:[#allocation1 + $0x8] sm:$0xff pattern:$0x73625140]
      %1376 = vrot.lane.b32.xlu0 %v1372, 100
      %v1377 = vpop.permute.xlu0 %1376
      %1378 = vrot.lane.b32.xlu0 %v1374, 100
      %v1379 = vpop.permute.xlu0 %1378
      %v1380 = vsel %vm469, %v1377, %v1379
      %v1382 = vsel %vm172, %v1369, 0
      %v1385 = vand.u32 %v1380, %v179
      %v1388 = vand.u32 %v1379, %v179
      %1390 = vmatpush.bf16.msra.mxu0 0
      %1391 = vmatpush.bf16.msra.mxu0 0
      %1392 = vmatpush.bf16.msra.mxu0 0
      %1393 = vmatpush.bf16.msra.mxu0 0
      %1394 = vmatpush.bf16.msra.mxu0 0
      %1395 = vmatpush.bf16.msra.mxu0 0
      %1396 = vmatpush.bf16.msra.mxu0 0
      %1397 = vmatpush.bf16.msra.mxu0 %v1385
      %1398 = vmatmul.bf16.gmra.mxu0 %v1382
      %v1399 = vpop.f32.mrf.mxu0
      %v1400 = vadd.f32 0.0, %v1399
      %v1401 = vpop.f32.mrf.mxu0
      %1402 = vdwg.mxu0
      %1403 = vmatpush.bf16.msra.mxu0 0
      %1404 = vmatpush.bf16.msra.mxu0 0
      %1405 = vmatpush.bf16.msra.mxu0 0
      %1406 = vmatpush.bf16.msra.mxu0 0
      %1407 = vmatpush.bf16.msra.mxu0 0
      %1408 = vmatpush.bf16.msra.mxu0 0
      %1409 = vmatpush.bf16.msra.mxu0 0
      %1410 = vmatpush.bf16.msra.mxu0 %v1388
      %1411 = vmatmul.bf16.gmra.mxu0 %v1382
      %v1412 = vpop.f32.mrf.mxu0
      %v1413 = vadd.f32 0.0, %v1412
      %v1414 = vpop.f32.mrf.mxu0
      %1415 = vdwg.mxu0
      %v1416 = vadd.f32 %v1365, %v1400
      %v1417 = vadd.f32 %v1366, %v1413
      %v1418 = vld [vmem:[%s1069] sm:$0xf]
      %s1419 = scalar_lea.vmem %s1, 100
      %v1420 = vld [vmem:[%s1419] sm:$0x7]
      %1422 = vst [vmem:[#allocation1] ss:$4 sm:$0xff] %v1418
      %v1423 = vld.sshfl [vmem:[#allocation1] sm:$0xff pattern:$0x73625140]
      %v1425 = vld.sshfl [vmem:[#allocation1 + $0x8] sm:$0xff pattern:$0x73625140]
      %1427 = vrot.lane.b32.xlu0 %v1423, 99
      %v1428 = vpop.permute.xlu0 %1427
      %1429 = vrot.lane.b32.xlu0 %v1425, 99
      %v1430 = vpop.permute.xlu0 %1429
      %v1431 = vsel %vm521, %v1428, %v1430
      %v1433 = vsel %vm172, %v1420, 0
      %v1436 = vand.u32 %v1431, %v179
      %v1439 = vand.u32 %v1430, %v179
      %1441 = vmatpush.bf16.msra.mxu0 0
      %1442 = vmatpush.bf16.msra.mxu0 0
      %1443 = vmatpush.bf16.msra.mxu0 0
      %1444 = vmatpush.bf16.msra.mxu0 0
      %1445 = vmatpush.bf16.msra.mxu0 0
      %1446 = vmatpush.bf16.msra.mxu0 0
      %1447 = vmatpush.bf16.msra.mxu0 0
      %1448 = vmatpush.bf16.msra.mxu0 %v1436
      %1449 = vmatmul.bf16.gmra.mxu0 %v1433
      %v1450 = vpop.f32.mrf.mxu0
      %v1451 = vadd.f32 0.0, %v1450
      %v1452 = vpop.f32.mrf.mxu0
      %1453 = vdwg.mxu0
      %1454 = vmatpush.bf16.msra.mxu0 0
      %1455 = vmatpush.bf16.msra.mxu0 0
      %1456 = vmatpush.bf16.msra.mxu0 0
      %1457 = vmatpush.bf16.msra.mxu0 0
      %1458 = vmatpush.bf16.msra.mxu0 0
      %1459 = vmatpush.bf16.msra.mxu0 0
      %1460 = vmatpush.bf16.msra.mxu0 0
      %1461 = vmatpush.bf16.msra.mxu0 %v1439
      %1462 = vmatmul.bf16.gmra.mxu0 %v1433
      %v1463 = vpop.f32.mrf.mxu0
      %v1464 = vadd.f32 0.0, %v1463
      %v1465 = vpop.f32.mrf.mxu0
      %1466 = vdwg.mxu0
      %v1467 = vadd.f32 %v1416, %v1451
      %v1468 = vadd.f32 %v1417, %v1464
      %v1469 = vld [vmem:[%s1069] sm:$0xf]
      %s1470 = scalar_lea.vmem %s1, 104
      %v1471 = vld [vmem:[%s1470] sm:$0x7]
      %1473 = vst [vmem:[#allocation1] ss:$4 sm:$0xff] %v1469
      %v1474 = vld.sshfl [vmem:[#allocation1] sm:$0xff pattern:$0x73625140]
      %v1476 = vld.sshfl [vmem:[#allocation1 + $0x8] sm:$0xff pattern:$0x73625140]
      %1478 = vrot.lane.b32.xlu0 %v1474, 98
      %v1479 = vpop.permute.xlu0 %1478
      %1480 = vrot.lane.b32.xlu0 %v1476, 98
      %v1481 = vpop.permute.xlu0 %1480
      %v1482 = vsel %vm573, %v1479, %v1481
      %v1484 = vsel %vm172, %v1471, 0
      %v1487 = vand.u32 %v1482, %v179
      %v1490 = vand.u32 %v1481, %v179
      %1492 = vmatpush.bf16.msra.mxu0 0
      %1493 = vmatpush.bf16.msra.mxu0 0
      %1494 = vmatpush.bf16.msra.mxu0 0
      %1495 = vmatpush.bf16.msra.mxu0 0
      %1496 = vmatpush.bf16.msra.mxu0 0
      %1497 = vmatpush.bf16.msra.mxu0 0
      %1498 = vmatpush.bf16.msra.mxu0 0
      %1499 = vmatpush.bf16.msra.mxu0 %v1487
      %1500 = vmatmul.bf16.gmra.mxu0 %v1484
      %v1501 = vpop.f32.mrf.mxu0
      %v1502 = vadd.f32 0.0, %v1501
      %v1503 = vpop.f32.mrf.mxu0
      %1504 = vdwg.mxu0
      %1505 = vmatpush.bf16.msra.mxu0 0
      %1506 = vmatpush.bf16.msra.mxu0 0
      %1507 = vmatpush.bf16.msra.mxu0 0
      %1508 = vmatpush.bf16.msra.mxu0 0
      %1509 = vmatpush.bf16.msra.mxu0 0
      %1510 = vmatpush.bf16.msra.mxu0 0
      %1511 = vmatpush.bf16.msra.mxu0 0
      %1512 = vmatpush.bf16.msra.mxu0 %v1490
      %1513 = vmatmul.bf16.gmra.mxu0 %v1484
      %v1514 = vpop.f32.mrf.mxu0
      %v1515 = vadd.f32 0.0, %v1514
      %v1516 = vpop.f32.mrf.mxu0
      %1517 = vdwg.mxu0
      %v1518 = vadd.f32 %v1467, %v1502
      %v1519 = vadd.f32 %v1468, %v1515
      %1521 = vset.pattern.permute.xlu0 0
      %1522 = vperm.xlu0 %1521, %v152
      %v1523 = vpop.permute.xlu0 %1522
      %v1525 = vadd.f32 %v1518, %v1523
      %v1526 = vadd.f32 %v1519, %v1523
      %v1527 = vmax.f32 %v1525, 0.0
      %v1528 = vmax.f32 %v1526, 0.0
      %v1529 = vpack.c.bf16 %v1528, %v1527
      %vm1530 = vcmask 1042432
      %vm1531 = vsmask.f32 2304
      %vm1532 = vmand %vm1530, %vm1531
      %vm1533 = vcmask 79876
      %vm1534 = vsmask.f32 6400
      %vm1535 = vmand %vm1533, %vm1534
      %vm1536 = vmor %vm1535, %vm1532
      %v1537 = vld [vmem:[%s150] sm:$0x77]
      %v1538 = vsel %vm1536, %v1529, %v1537
      %1539 = vst [vmem:[%s150] sm:$0x77] %v1538
      %vm1540 = vcmask 92240
      %vm1541 = vmand %vm1540, %vm1531
      %v1542 = vld [vmem:[%s150 + $0x4] sm:$0x7]
      %v1543 = vsel %vm1541, 0, %v1542
      %1544 = vst [vmem:[%s150 + $0x4] sm:$0x7] %v1543
      %p1545 = scmp.lt.s32.totalorder %s14, 4
      %s1546 = scalar_select %p1545, %s14, 4
      %s1547 = smul.addr %s1546, 2
      %s1548 = smul.addr %s1547, 4
      %s1549 = scalar_lea.vmem %s3, %s1548
      // Predicated region
      $region33: #{_lambda_.2} parent=31 // pred_check
        %p1550 = pneg %p95
      $region34: #{_lambda_.2} parent=31 // pred_check_branch
        %1552 = sbr.rel (%p1550) target = $region36
      $region35: #{_lambda_.2} parent=31 // pred_region
        _
      $region36: #{_lambda_.2} parent=31 // pred_fallthru
        _
    $region32: #{_lambda_.2} parent=5 // pred_fallthru
      _
    %p1553 = scmp.le.s32.totalorder 2, %s9
    // Predicated region
    $region37: #{_lambda_.2} parent=5 // pred_check
      %p1554 = pneg %p1553
    $region38: #{_lambda_.2} parent=5 // pred_check_branch
      %1556 = sbr.rel (%p1554) target = $region40
    $region39: #{_lambda_.2} parent=5 // pred_region
      %s1557 = ssub.s32 %s9, 2
      // Predicated region
      $region41: #{_lambda_.2} parent=39 // pred_check
        %p1558 = pneg %p101
      $region42: #{_lambda_.2} parent=39 // pred_check_branch
        %1560 = sbr.rel (%p1558) target = $region44
      $region43: #{_lambda_.2} parent=39 // pred_region
        %p1561 = scmp.lt.s32.totalorder %s15, 4
        %s1562 = scalar_select %p1561, %s15, 4
        %s1563 = smul.addr %s1562, 2
        %s1564 = smul.addr %s1563, 4
        %s1565 = scalar_lea.vmem %s3, %s1564
      $region44: #{_lambda_.2} parent=39 // pred_fallthru
        _
    $region40: #{_lambda_.2} parent=5 // pred_fallthru
      _
  $region6: #{_lambda_.2} parent=0 // loop_footer
    %s13 = sadd.s32 1, %s9
  $region7: #{_lambda_.2} parent=0 // loop_footer_branch
    %8 = sbr.rel target = $region3
  $region8: #{_lambda_.2} parent=0 // loop_exit
    _

</llo_original>
